<compile_context>
chip_gen: v7x
topology: tpu7x:2x2x1
jax: 0.10.0
libtpu: 0.0.40
codegen_flags: <defaults>
</compile_context>

<pallas_src>
import functools

import jax
import jax.numpy as jnp
from jax.experimental import pallas as pl
from jax.experimental.pallas import tpu as pltpu  # noqa: F401  (kept for TODOs)


# ---------------------------------------------------------------------------
# Fused Pallas kernel: num_layers LSTM layers + FC, whole sequence, one call
# ---------------------------------------------------------------------------
def _build_fused_lstm_kernel(num_layers, seq_len, batch, hidden):
    """Builds the fused kernel.

    Kernel args (all full-array VMEM refs, no grid):
      x_ref                      : (T*B, D_in)  time-major flattened input
      for each layer l:          w_ih_t (D_l, 4H), w_hh_t (H, 4H), b (1, 4H)
                                 -- gate columns reordered to [i, f, o, g],
                                    i/f/o columns pre-scaled by 0.5
      w_fc_t (H, O), b_fc (1, O)
      out_ref                    : (T*B, O)     time-major flattened output
    """
    T, B, H = seq_len, batch, hidden
    n_params = 3 * num_layers + 2

    def kernel(*args):
        x_ref = args[0]
        p = args[1:1 + n_params]
        out_ref = args[1 + n_params]

        cur = x_ref[...]                                   # (T*B, D_in)
        for layer in range(num_layers):
            w_ih_t = p[3 * layer][...]                     # (D_in, 4H)
            w_hh_t = p[3 * layer + 1][...]                 # (H, 4H)
            b = p[3 * layer + 2][...]                      # (1, 4H)

            # Hoisted input projection for the whole sequence: one MXU matmul,
            # bias broadcast done once (outside the serial loop).
            gx = jnp.dot(cur, w_ih_t,
                         preferred_element_type=jnp.float32) + b   # (T*B, 4H)

            h = jnp.zeros((B, H), jnp.float32)
            c = jnp.zeros((B, H), jnp.float32)
            h_seq = []
            for t in range(T):                             # static, fully unrolled
                pre = gx[t * B:(t + 1) * B, :] + jnp.dot(
                    h, w_hh_t, preferred_element_type=jnp.float32)  # (B, 4H)
                # Single EUP pass over the full (B, 4H) = (8, 128) vreg.
                # i/f/o pre-activations were pre-scaled by 0.5, so
                # sigmoid(x) = 0.5 * tanh(x/2) + 0.5 comes out of the same tanh.
                tg = jnp.tanh(pre)
                ifo = 0.5 * tg[:, 0:3 * H] + 0.5           # pure VPU
                i_g = ifo[:, 0:H]
                f_g = ifo[:, H:2 * H]
                o_g = ifo[:, 2 * H:3 * H]
                g_g = tg[:, 3 * H:4 * H]
                c = f_g * c + i_g * g_g
                h = o_g * jnp.tanh(c)
                h_seq.append(h)
            # Register-resident hidden sequence, time-major for the next layer.
            cur = jnp.concatenate(h_seq, axis=0)           # (T*B, H)

        # Fused final Linear over all timesteps.
        w_fc_t = p[3 * num_layers][...]                    # (H, O)
        b_fc = p[3 * num_layers + 1][...]                  # (1, O)
        out_ref[...] = jnp.dot(cur, w_fc_t,
                               preferred_element_type=jnp.float32) + b_fc

    return kernel


# ---------------------------------------------------------------------------
# Wrapper
# ---------------------------------------------------------------------------
def my_lstm_model_forward(x_btd, prepared, num_layers, hidden_size):
    """Forward pass matching MyLSTMModel.forward.

    x_btd: (B, T, input_size), batch_first like PyTorch.
    prepared: output of prepare_params() (reordered/pre-scaled weights).
    Returns (B, T, output_size).
    """
    B, T, D = x_btd.shape
    H = hidden_size
    w_fc_t, b_fc = prepared["fc"]
    O = w_fc_t.shape[1]

    # Sublane-align the batch: pad to a multiple of 8 so every per-step
    # (B, 4H) slab is a full 8x128 vreg.  Padded rows are independent batch
    # rows (zero input) and get sliced away below.
    Bp = ((B + 7) // 8) * 8
    if Bp != B:
        x_btd = jnp.pad(x_btd, ((0, Bp - B), (0, 0), (0, 0)))

    flat = []
    for layer in range(num_layers):
        flat.extend(prepared["lstm"][layer])               # (w_ih_t, w_hh_t, b)
    flat.extend([w_fc_t, b_fc])

    # Time-major flattened view: row = t * Bp + b -> per-timestep rows are
    # contiguous, tile-aligned sublane slabs inside the kernel.
    x_tb = jnp.swapaxes(x_btd, 0, 1).reshape(T * Bp, D)

    kernel = _build_fused_lstm_kernel(num_layers, T, Bp, H)
    in_specs = [pl.BlockSpec(x_tb.shape, lambda: (0, 0))]
    in_specs += [pl.BlockSpec(w.shape, lambda: (0, 0)) for w in flat]

    out2d = pl.pallas_call(
        kernel,
        out_shape=jax.ShapeDtypeStruct((T * Bp, O), jnp.float32),
        in_specs=in_specs,
        out_specs=pl.BlockSpec((T * Bp, O), lambda: (0, 0)),
    )(x_tb, *flat)

    out_tbo = out2d.reshape(T, Bp, O)[:, :B, :]
    return jnp.swapaxes(out_tbo, 0, 1)                     # (B, T, O)


# ---------------------------------------------------------------------------
# One-time parameter preparation (outside the jitted forward):
#   * transpose weights, sum biases
#   * reorder gate columns [i, f, g, o] -> [i, f, o, g]
#   * pre-scale i/f/o columns by 0.5 (sigmoid-via-tanh trick)
# ---------------------------------------------------------------------------
def prepare_params(params, hidden_size):
    H = hidden_size

    def reorder_and_scale(m):
        # m: (rows, 4H) with PyTorch column order [i, f, g, o]
        i = m[:, 0:H]
        f = m[:, H:2 * H]
        g = m[:, 2 * H:3 * H]
        o = m[:, 3 * H:4 * H]
        return jnp.concatenate([0.5 * i, 0.5 * f, 0.5 * o, g], axis=1)

    prepared = {"lstm": [], "fc": None}
    for (w_ih, w_hh, b_ih, b_hh) in params["lstm"]:
        prepared["lstm"].append((
            reorder_and_scale(jnp.transpose(w_ih)),                  # (D_in, 4H)
            reorder_and_scale(jnp.transpose(w_hh)),                  # (H, 4H)
            reorder_and_scale((b_ih + b_hh).reshape(1, 4 * H)),      # (1, 4H)
        ))
    w_fc, b_fc = params["fc"]
    prepared["fc"] = (jnp.transpose(w_fc), b_fc.reshape(1, -1))      # (H, O), (1, O)
    return prepared


# ---------------------------------------------------------------------------
# Deterministic parameter init (PyTorch-style uniform(-1/sqrt(H), 1/sqrt(H)))
# ---------------------------------------------------------------------------
def init_params(key, input_size, hidden_size, num_layers, output_size):
    params = {"lstm": [], "fc": None}
    bound = 1.0 / jnp.sqrt(hidden_size)
    for layer in range(num_layers):
        d_in = input_size if layer == 0 else hidden_size
        key, k1, k2, k3, k4 = jax.random.split(key, 5)
        w_ih = jax.random.uniform(k1, (4 * hidden_size, d_in),
                                  minval=-bound, maxval=bound, dtype=jnp.float32)
        w_hh = jax.random.uniform(k2, (4 * hidden_size, hidden_size),
                                  minval=-bound, maxval=bound, dtype=jnp.float32)
        b_ih = jax.random.uniform(k3, (4 * hidden_size,),
                                  minval=-bound, maxval=bound, dtype=jnp.float32)
        b_hh = jax.random.uniform(k4, (4 * hidden_size,),
                                  minval=-bound, maxval=bound, dtype=jnp.float32)
        params["lstm"].append((w_ih, w_hh, b_ih, b_hh))
    key, k1, k2 = jax.random.split(key, 3)
    fc_bound = 1.0 / jnp.sqrt(hidden_size)
    w_fc = jax.random.uniform(k1, (output_size, hidden_size),
                              minval=-fc_bound, maxval=fc_bound, dtype=jnp.float32)
    b_fc = jax.random.uniform(k2, (output_size,),
                              minval=-fc_bound, maxval=fc_bound, dtype=jnp.float32)
    params["fc"] = (w_fc, b_fc)
    return params


# ---------------------------------------------------------------------------
# Pure-JAX reference (lax.scan) for correctness check
# ---------------------------------------------------------------------------
def reference_forward(x_btd, params, num_layers, hidden_size):
    out = x_btd
    for layer in range(num_layers):
        w_ih, w_hh, b_ih, b_hh = params["lstm"][layer]
        B = out.shape[0]

        def step(carry, x_t):
            h, c = carry
            gates = x_t @ w_ih.T + b_ih + h @ w_hh.T + b_hh
            i, f, g, o = jnp.split(gates, 4, axis=-1)
            i, f, o = jax.nn.sigmoid(i), jax.nn.sigmoid(f), jax.nn.sigmoid(o)
            g = jnp.tanh(g)
            c = f * c + i * g
            h = o * jnp.tanh(c)
            return (h, c), h

        h0 = jnp.zeros((B, hidden_size), jnp.float32)
        c0 = jnp.zeros((B, hidden_size), jnp.float32)
        _, hs = jax.lax.scan(step, (h0, c0), jnp.swapaxes(out, 0, 1))
        out = jnp.swapaxes(hs, 0, 1)
    w_fc, b_fc = params["fc"]
    return out @ w_fc.T + b_fc


# ---------------------------------------------------------------------------
if __name__ == "__main__":
    # Small, deterministic shapes consistent with the module:
    # batch=4, seq=8, input_size=16, hidden_size=32, num_layers=2, output_size=8
    B, T, INPUT, HIDDEN, LAYERS, OUTPUT = 4, 8, 16, 32, 2, 8

    key = jax.random.PRNGKey(0)
    key, xkey = jax.random.split(key)
    x = jax.random.normal(xkey, (B, T, INPUT), dtype=jnp.float32)

    params = init_params(key, INPUT, HIDDEN, LAYERS, OUTPUT)
    prepared = prepare_params(params, HIDDEN)   # one-time weight prep

    fwd = jax.jit(functools.partial(my_lstm_model_forward,
                                    num_layers=LAYERS, hidden_size=HIDDEN))
    out = fwd(x, prepared)
    jax.block_until_ready(out)

    ref = reference_forward(x, params, LAYERS, HIDDEN)
    assert out.shape == (B, T, OUTPUT), out.shape
    max_err = float(jnp.max(jnp.abs(out - ref)))
    assert jnp.allclose(out, ref, atol=1e-4, rtol=1e-4), max_err

    print("KERNEL_OK")
</pallas_src>

<mosaic_0001>
module attributes {stable_mosaic.version = 11 : i64} {
  func.func @kernel(%arg0: memref<64x16xf32, #tpu.memory_space<vmem>>, %arg1: memref<16x128xf32, #tpu.memory_space<vmem>>, %arg2: memref<32x128xf32, #tpu.memory_space<vmem>>, %arg3: memref<1x128xf32, #tpu.memory_space<vmem>>, %arg4: memref<32x128xf32, #tpu.memory_space<vmem>>, %arg5: memref<32x128xf32, #tpu.memory_space<vmem>>, %arg6: memref<1x128xf32, #tpu.memory_space<vmem>>, %arg7: memref<32x8xf32, #tpu.memory_space<vmem>>, %arg8: memref<1x8xf32, #tpu.memory_space<vmem>>, %arg9: memref<64x8xf32, #tpu.memory_space<vmem>>) attributes {dimension_semantics = [], scalar_prefetch = 0 : i64, scratch_operands = 0 : i64, tpu.core_type = #tpu.core_type<tc>} {
    %c0 = arith.constant 0 : index
    %c0_0 = arith.constant 0 : index
    %0 = vector.load %arg0[%c0, %c0_0] : memref<64x16xf32, #tpu.memory_space<vmem>>, vector<64x16xf32>
    %c0_1 = arith.constant 0 : index
    %c0_2 = arith.constant 0 : index
    %1 = vector.load %arg1[%c0_1, %c0_2] : memref<16x128xf32, #tpu.memory_space<vmem>>, vector<16x128xf32>
    %c0_3 = arith.constant 0 : index
    %c0_4 = arith.constant 0 : index
    %2 = vector.load %arg2[%c0_3, %c0_4] : memref<32x128xf32, #tpu.memory_space<vmem>>, vector<32x128xf32>
    %c0_5 = arith.constant 0 : index
    %c0_6 = arith.constant 0 : index
    %3 = vector.load %arg3[%c0_5, %c0_6] : memref<1x128xf32, #tpu.memory_space<vmem>>, vector<1x128xf32>
    %cst = arith.constant dense<0.000000e+00> : vector<64x128xf32>
    %4 = tpu.matmul %0, %1, %cst {dimension_numbers = #tpu.dot_dimension_numbers<[1], [0], [0], [1], [0, 0, 1, 1], [], []>} : vector<64x16xf32>, vector<16x128xf32>, vector<64x128xf32> -> vector<64x128xf32>
    %5 = vector.broadcast %3 : vector<1x128xf32> to vector<64x128xf32>
    %6 = arith.addf %4, %5 : vector<64x128xf32>
    %cst_7 = arith.constant 0.000000e+00 : f32
    %7 = vector.broadcast %cst_7 : f32 to vector<8x32xf32>
    %cst_8 = arith.constant 0.000000e+00 : f32
    %8 = vector.broadcast %cst_8 : f32 to vector<8x32xf32>
    %9 = vector.extract_strided_slice %6 {offsets = [0, 0], sizes = [8, 128], strides = [1, 1]} : vector<64x128xf32> to vector<8x128xf32>
    %cst_9 = arith.constant dense<0.000000e+00> : vector<8x128xf32>
    %10 = tpu.matmul %7, %2, %cst_9 {dimension_numbers = #tpu.dot_dimension_numbers<[1], [0], [0], [1], [0, 0, 1, 1], [], []>} : vector<8x32xf32>, vector<32x128xf32>, vector<8x128xf32> -> vector<8x128xf32>
    %11 = arith.addf %9, %10 : vector<8x128xf32>
    %12 = math.tanh %11 : vector<8x128xf32>
    %13 = vector.extract_strided_slice %12 {offsets = [0, 0], sizes = [8, 96], strides = [1, 1]} : vector<8x128xf32> to vector<8x96xf32>
    %cst_10 = arith.constant 5.000000e-01 : f32
    %14 = vector.broadcast %cst_10 : f32 to vector<8x96xf32>
    %15 = arith.mulf %14, %13 : vector<8x96xf32>
    %cst_11 = arith.constant 5.000000e-01 : f32
    %16 = vector.broadcast %cst_11 : f32 to vector<8x96xf32>
    %17 = arith.addf %15, %16 : vector<8x96xf32>
    %18 = vector.extract_strided_slice %17 {offsets = [0, 0], sizes = [8, 32], strides = [1, 1]} : vector<8x96xf32> to vector<8x32xf32>
    %19 = vector.extract_strided_slice %17 {offsets = [0, 32], sizes = [8, 32], strides = [1, 1]} : vector<8x96xf32> to vector<8x32xf32>
    %20 = vector.extract_strided_slice %17 {offsets = [0, 64], sizes = [8, 32], strides = [1, 1]} : vector<8x96xf32> to vector<8x32xf32>
    %21 = vector.extract_strided_slice %12 {offsets = [0, 96], sizes = [8, 32], strides = [1, 1]} : vector<8x128xf32> to vector<8x32xf32>
    %22 = arith.mulf %19, %8 : vector<8x32xf32>
    %23 = arith.mulf %18, %21 : vector<8x32xf32>
    %24 = arith.addf %22, %23 : vector<8x32xf32>
    %25 = math.tanh %24 : vector<8x32xf32>
    %26 = arith.mulf %20, %25 : vector<8x32xf32>
    %27 = vector.extract_strided_slice %6 {offsets = [8, 0], sizes = [8, 128], strides = [1, 1]} : vector<64x128xf32> to vector<8x128xf32>
    %cst_12 = arith.constant dense<0.000000e+00> : vector<8x128xf32>
    %28 = tpu.matmul %26, %2, %cst_12 {dimension_numbers = #tpu.dot_dimension_numbers<[1], [0], [0], [1], [0, 0, 1, 1], [], []>} : vector<8x32xf32>, vector<32x128xf32>, vector<8x128xf32> -> vector<8x128xf32>
    %29 = arith.addf %27, %28 : vector<8x128xf32>
    %30 = math.tanh %29 : vector<8x128xf32>
    %31 = vector.extract_strided_slice %30 {offsets = [0, 0], sizes = [8, 96], strides = [1, 1]} : vector<8x128xf32> to vector<8x96xf32>
    %cst_13 = arith.constant 5.000000e-01 : f32
    %32 = vector.broadcast %cst_13 : f32 to vector<8x96xf32>
    %33 = arith.mulf %32, %31 : vector<8x96xf32>
    %cst_14 = arith.constant 5.000000e-01 : f32
    %34 = vector.broadcast %cst_14 : f32 to vector<8x96xf32>
    %35 = arith.addf %33, %34 : vector<8x96xf32>
    %36 = vector.extract_strided_slice %35 {offsets = [0, 0], sizes = [8, 32], strides = [1, 1]} : vector<8x96xf32> to vector<8x32xf32>
    %37 = vector.extract_strided_slice %35 {offsets = [0, 32], sizes = [8, 32], strides = [1, 1]} : vector<8x96xf32> to vector<8x32xf32>
    %38 = vector.extract_strided_slice %35 {offsets = [0, 64], sizes = [8, 32], strides = [1, 1]} : vector<8x96xf32> to vector<8x32xf32>
    %39 = vector.extract_strided_slice %30 {offsets = [0, 96], sizes = [8, 32], strides = [1, 1]} : vector<8x128xf32> to vector<8x32xf32>
    %40 = arith.mulf %37, %24 : vector<8x32xf32>
    %41 = arith.mulf %36, %39 : vector<8x32xf32>
    %42 = arith.addf %40, %41 : vector<8x32xf32>
    %43 = math.tanh %42 : vector<8x32xf32>
    %44 = arith.mulf %38, %43 : vector<8x32xf32>
    %45 = vector.extract_strided_slice %6 {offsets = [16, 0], sizes = [8, 128], strides = [1, 1]} : vector<64x128xf32> to vector<8x128xf32>
    %cst_15 = arith.constant dense<0.000000e+00> : vector<8x128xf32>
    %46 = tpu.matmul %44, %2, %cst_15 {dimension_numbers = #tpu.dot_dimension_numbers<[1], [0], [0], [1], [0, 0, 1, 1], [], []>} : vector<8x32xf32>, vector<32x128xf32>, vector<8x128xf32> -> vector<8x128xf32>
    %47 = arith.addf %45, %46 : vector<8x128xf32>
    %48 = math.tanh %47 : vector<8x128xf32>
    %49 = vector.extract_strided_slice %48 {offsets = [0, 0], sizes = [8, 96], strides = [1, 1]} : vector<8x128xf32> to vector<8x96xf32>
    %cst_16 = arith.constant 5.000000e-01 : f32
    %50 = vector.broadcast %cst_16 : f32 to vector<8x96xf32>
    %51 = arith.mulf %50, %49 : vector<8x96xf32>
    %cst_17 = arith.constant 5.000000e-01 : f32
    %52 = vector.broadcast %cst_17 : f32 to vector<8x96xf32>
    %53 = arith.addf %51, %52 : vector<8x96xf32>
    %54 = vector.extract_strided_slice %53 {offsets = [0, 0], sizes = [8, 32], strides = [1, 1]} : vector<8x96xf32> to vector<8x32xf32>
    %55 = vector.extract_strided_slice %53 {offsets = [0, 32], sizes = [8, 32], strides = [1, 1]} : vector<8x96xf32> to vector<8x32xf32>
    %56 = vector.extract_strided_slice %53 {offsets = [0, 64], sizes = [8, 32], strides = [1, 1]} : vector<8x96xf32> to vector<8x32xf32>
    %57 = vector.extract_strided_slice %48 {offsets = [0, 96], sizes = [8, 32], strides = [1, 1]} : vector<8x128xf32> to vector<8x32xf32>
    %58 = arith.mulf %55, %42 : vector<8x32xf32>
    %59 = arith.mulf %54, %57 : vector<8x32xf32>
    %60 = arith.addf %58, %59 : vector<8x32xf32>
    %61 = math.tanh %60 : vector<8x32xf32>
    %62 = arith.mulf %56, %61 : vector<8x32xf32>
    %63 = vector.extract_strided_slice %6 {offsets = [24, 0], sizes = [8, 128], strides = [1, 1]} : vector<64x128xf32> to vector<8x128xf32>
    %cst_18 = arith.constant dense<0.000000e+00> : vector<8x128xf32>
    %64 = tpu.matmul %62, %2, %cst_18 {dimension_numbers = #tpu.dot_dimension_numbers<[1], [0], [0], [1], [0, 0, 1, 1], [], []>} : vector<8x32xf32>, vector<32x128xf32>, vector<8x128xf32> -> vector<8x128xf32>
    %65 = arith.addf %63, %64 : vector<8x128xf32>
    %66 = math.tanh %65 : vector<8x128xf32>
    %67 = vector.extract_strided_slice %66 {offsets = [0, 0], sizes = [8, 96], strides = [1, 1]} : vector<8x128xf32> to vector<8x96xf32>
    %cst_19 = arith.constant 5.000000e-01 : f32
    %68 = vector.broadcast %cst_19 : f32 to vector<8x96xf32>
    %69 = arith.mulf %68, %67 : vector<8x96xf32>
    %cst_20 = arith.constant 5.000000e-01 : f32
    %70 = vector.broadcast %cst_20 : f32 to vector<8x96xf32>
    %71 = arith.addf %69, %70 : vector<8x96xf32>
    %72 = vector.extract_strided_slice %71 {offsets = [0, 0], sizes = [8, 32], strides = [1, 1]} : vector<8x96xf32> to vector<8x32xf32>
    %73 = vector.extract_strided_slice %71 {offsets = [0, 32], sizes = [8, 32], strides = [1, 1]} : vector<8x96xf32> to vector<8x32xf32>
    %74 = vector.extract_strided_slice %71 {offsets = [0, 64], sizes = [8, 32], strides = [1, 1]} : vector<8x96xf32> to vector<8x32xf32>
    %75 = vector.extract_strided_slice %66 {offsets = [0, 96], sizes = [8, 32], strides = [1, 1]} : vector<8x128xf32> to vector<8x32xf32>
    %76 = arith.mulf %73, %60 : vector<8x32xf32>
    %77 = arith.mulf %72, %75 : vector<8x32xf32>
    %78 = arith.addf %76, %77 : vector<8x32xf32>
    %79 = math.tanh %78 : vector<8x32xf32>
    %80 = arith.mulf %74, %79 : vector<8x32xf32>
    %81 = vector.extract_strided_slice %6 {offsets = [32, 0], sizes = [8, 128], strides = [1, 1]} : vector<64x128xf32> to vector<8x128xf32>
    %cst_21 = arith.constant dense<0.000000e+00> : vector<8x128xf32>
    %82 = tpu.matmul %80, %2, %cst_21 {dimension_numbers = #tpu.dot_dimension_numbers<[1], [0], [0], [1], [0, 0, 1, 1], [], []>} : vector<8x32xf32>, vector<32x128xf32>, vector<8x128xf32> -> vector<8x128xf32>
    %83 = arith.addf %81, %82 : vector<8x128xf32>
    %84 = math.tanh %83 : vector<8x128xf32>
    %85 = vector.extract_strided_slice %84 {offsets = [0, 0], sizes = [8, 96], strides = [1, 1]} : vector<8x128xf32> to vector<8x96xf32>
    %cst_22 = arith.constant 5.000000e-01 : f32
    %86 = vector.broadcast %cst_22 : f32 to vector<8x96xf32>
    %87 = arith.mulf %86, %85 : vector<8x96xf32>
    %cst_23 = arith.constant 5.000000e-01 : f32
    %88 = vector.broadcast %cst_23 : f32 to vector<8x96xf32>
    %89 = arith.addf %87, %88 : vector<8x96xf32>
    %90 = vector.extract_strided_slice %89 {offsets = [0, 0], sizes = [8, 32], strides = [1, 1]} : vector<8x96xf32> to vector<8x32xf32>
    %91 = vector.extract_strided_slice %89 {offsets = [0, 32], sizes = [8, 32], strides = [1, 1]} : vector<8x96xf32> to vector<8x32xf32>
    %92 = vector.extract_strided_slice %89 {offsets = [0, 64], sizes = [8, 32], strides = [1, 1]} : vector<8x96xf32> to vector<8x32xf32>
    %93 = vector.extract_strided_slice %84 {offsets = [0, 96], sizes = [8, 32], strides = [1, 1]} : vector<8x128xf32> to vector<8x32xf32>
    %94 = arith.mulf %91, %78 : vector<8x32xf32>
    %95 = arith.mulf %90, %93 : vector<8x32xf32>
    %96 = arith.addf %94, %95 : vector<8x32xf32>
    %97 = math.tanh %96 : vector<8x32xf32>
    %98 = arith.mulf %92, %97 : vector<8x32xf32>
    %99 = vector.extract_strided_slice %6 {offsets = [40, 0], sizes = [8, 128], strides = [1, 1]} : vector<64x128xf32> to vector<8x128xf32>
    %cst_24 = arith.constant dense<0.000000e+00> : vector<8x128xf32>
    %100 = tpu.matmul %98, %2, %cst_24 {dimension_numbers = #tpu.dot_dimension_numbers<[1], [0], [0], [1], [0, 0, 1, 1], [], []>} : vector<8x32xf32>, vector<32x128xf32>, vector<8x128xf32> -> vector<8x128xf32>
    %101 = arith.addf %99, %100 : vector<8x128xf32>
    %102 = math.tanh %101 : vector<8x128xf32>
    %103 = vector.extract_strided_slice %102 {offsets = [0, 0], sizes = [8, 96], strides = [1, 1]} : vector<8x128xf32> to vector<8x96xf32>
    %cst_25 = arith.constant 5.000000e-01 : f32
    %104 = vector.broadcast %cst_25 : f32 to vector<8x96xf32>
    %105 = arith.mulf %104, %103 : vector<8x96xf32>
    %cst_26 = arith.constant 5.000000e-01 : f32
    %106 = vector.broadcast %cst_26 : f32 to vector<8x96xf32>
    %107 = arith.addf %105, %106 : vector<8x96xf32>
    %108 = vector.extract_strided_slice %107 {offsets = [0, 0], sizes = [8, 32], strides = [1, 1]} : vector<8x96xf32> to vector<8x32xf32>
    %109 = vector.extract_strided_slice %107 {offsets = [0, 32], sizes = [8, 32], strides = [1, 1]} : vector<8x96xf32> to vector<8x32xf32>
    %110 = vector.extract_strided_slice %107 {offsets = [0, 64], sizes = [8, 32], strides = [1, 1]} : vector<8x96xf32> to vector<8x32xf32>
    %111 = vector.extract_strided_slice %102 {offsets = [0, 96], sizes = [8, 32], strides = [1, 1]} : vector<8x128xf32> to vector<8x32xf32>
    %112 = arith.mulf %109, %96 : vector<8x32xf32>
    %113 = arith.mulf %108, %111 : vector<8x32xf32>
    %114 = arith.addf %112, %113 : vector<8x32xf32>
    %115 = math.tanh %114 : vector<8x32xf32>
    %116 = arith.mulf %110, %115 : vector<8x32xf32>
    %117 = vector.extract_strided_slice %6 {offsets = [48, 0], sizes = [8, 128], strides = [1, 1]} : vector<64x128xf32> to vector<8x128xf32>
    %cst_27 = arith.constant dense<0.000000e+00> : vector<8x128xf32>
    %118 = tpu.matmul %116, %2, %cst_27 {dimension_numbers = #tpu.dot_dimension_numbers<[1], [0], [0], [1], [0, 0, 1, 1], [], []>} : vector<8x32xf32>, vector<32x128xf32>, vector<8x128xf32> -> vector<8x128xf32>
    %119 = arith.addf %117, %118 : vector<8x128xf32>
    %120 = math.tanh %119 : vector<8x128xf32>
    %121 = vector.extract_strided_slice %120 {offsets = [0, 0], sizes = [8, 96], strides = [1, 1]} : vector<8x128xf32> to vector<8x96xf32>
    %cst_28 = arith.constant 5.000000e-01 : f32
    %122 = vector.broadcast %cst_28 : f32 to vector<8x96xf32>
    %123 = arith.mulf %122, %121 : vector<8x96xf32>
    %cst_29 = arith.constant 5.000000e-01 : f32
    %124 = vector.broadcast %cst_29 : f32 to vector<8x96xf32>
    %125 = arith.addf %123, %124 : vector<8x96xf32>
    %126 = vector.extract_strided_slice %125 {offsets = [0, 0], sizes = [8, 32], strides = [1, 1]} : vector<8x96xf32> to vector<8x32xf32>
    %127 = vector.extract_strided_slice %125 {offsets = [0, 32], sizes = [8, 32], strides = [1, 1]} : vector<8x96xf32> to vector<8x32xf32>
    %128 = vector.extract_strided_slice %125 {offsets = [0, 64], sizes = [8, 32], strides = [1, 1]} : vector<8x96xf32> to vector<8x32xf32>
    %129 = vector.extract_strided_slice %120 {offsets = [0, 96], sizes = [8, 32], strides = [1, 1]} : vector<8x128xf32> to vector<8x32xf32>
    %130 = arith.mulf %127, %114 : vector<8x32xf32>
    %131 = arith.mulf %126, %129 : vector<8x32xf32>
    %132 = arith.addf %130, %131 : vector<8x32xf32>
    %133 = math.tanh %132 : vector<8x32xf32>
    %134 = arith.mulf %128, %133 : vector<8x32xf32>
    %135 = vector.extract_strided_slice %6 {offsets = [56, 0], sizes = [8, 128], strides = [1, 1]} : vector<64x128xf32> to vector<8x128xf32>
    %cst_30 = arith.constant dense<0.000000e+00> : vector<8x128xf32>
    %136 = tpu.matmul %134, %2, %cst_30 {dimension_numbers = #tpu.dot_dimension_numbers<[1], [0], [0], [1], [0, 0, 1, 1], [], []>} : vector<8x32xf32>, vector<32x128xf32>, vector<8x128xf32> -> vector<8x128xf32>
    %137 = arith.addf %135, %136 : vector<8x128xf32>
    %138 = math.tanh %137 : vector<8x128xf32>
    %139 = vector.extract_strided_slice %138 {offsets = [0, 0], sizes = [8, 96], strides = [1, 1]} : vector<8x128xf32> to vector<8x96xf32>
    %cst_31 = arith.constant 5.000000e-01 : f32
    %140 = vector.broadcast %cst_31 : f32 to vector<8x96xf32>
    %141 = arith.mulf %140, %139 : vector<8x96xf32>
    %cst_32 = arith.constant 5.000000e-01 : f32
    %142 = vector.broadcast %cst_32 : f32 to vector<8x96xf32>
    %143 = arith.addf %141, %142 : vector<8x96xf32>
    %144 = vector.extract_strided_slice %143 {offsets = [0, 0], sizes = [8, 32], strides = [1, 1]} : vector<8x96xf32> to vector<8x32xf32>
    %145 = vector.extract_strided_slice %143 {offsets = [0, 32], sizes = [8, 32], strides = [1, 1]} : vector<8x96xf32> to vector<8x32xf32>
    %146 = vector.extract_strided_slice %143 {offsets = [0, 64], sizes = [8, 32], strides = [1, 1]} : vector<8x96xf32> to vector<8x32xf32>
    %147 = vector.extract_strided_slice %138 {offsets = [0, 96], sizes = [8, 32], strides = [1, 1]} : vector<8x128xf32> to vector<8x32xf32>
    %148 = arith.mulf %145, %132 : vector<8x32xf32>
    %149 = arith.mulf %144, %147 : vector<8x32xf32>
    %150 = arith.addf %148, %149 : vector<8x32xf32>
    %151 = math.tanh %150 : vector<8x32xf32>
    %152 = arith.mulf %146, %151 : vector<8x32xf32>
    %153 = tpu.concatenate %26, %44, %62, %80, %98, %116, %134, %152 in 0 : vector<8x32xf32>, vector<8x32xf32>, vector<8x32xf32>, vector<8x32xf32>, vector<8x32xf32>, vector<8x32xf32>, vector<8x32xf32>, vector<8x32xf32> -> vector<64x32xf32>
    %c0_33 = arith.constant 0 : index
    %c0_34 = arith.constant 0 : index
    %154 = vector.load %arg4[%c0_33, %c0_34] : memref<32x128xf32, #tpu.memory_space<vmem>>, vector<32x128xf32>
    %c0_35 = arith.constant 0 : index
    %c0_36 = arith.constant 0 : index
    %155 = vector.load %arg5[%c0_35, %c0_36] : memref<32x128xf32, #tpu.memory_space<vmem>>, vector<32x128xf32>
    %c0_37 = arith.constant 0 : index
    %c0_38 = arith.constant 0 : index
    %156 = vector.load %arg6[%c0_37, %c0_38] : memref<1x128xf32, #tpu.memory_space<vmem>>, vector<1x128xf32>
    %cst_39 = arith.constant dense<0.000000e+00> : vector<64x128xf32>
    %157 = tpu.matmul %153, %154, %cst_39 {dimension_numbers = #tpu.dot_dimension_numbers<[1], [0], [0], [1], [0, 0, 1, 1], [], []>} : vector<64x32xf32>, vector<32x128xf32>, vector<64x128xf32> -> vector<64x128xf32>
    %158 = vector.broadcast %156 : vector<1x128xf32> to vector<64x128xf32>
    %159 = arith.addf %157, %158 : vector<64x128xf32>
    %cst_40 = arith.constant 0.000000e+00 : f32
    %160 = vector.broadcast %cst_40 : f32 to vector<8x32xf32>
    %cst_41 = arith.constant 0.000000e+00 : f32
    %161 = vector.broadcast %cst_41 : f32 to vector<8x32xf32>
    %162 = vector.extract_strided_slice %159 {offsets = [0, 0], sizes = [8, 128], strides = [1, 1]} : vector<64x128xf32> to vector<8x128xf32>
    %cst_42 = arith.constant dense<0.000000e+00> : vector<8x128xf32>
    %163 = tpu.matmul %160, %155, %cst_42 {dimension_numbers = #tpu.dot_dimension_numbers<[1], [0], [0], [1], [0, 0, 1, 1], [], []>} : vector<8x32xf32>, vector<32x128xf32>, vector<8x128xf32> -> vector<8x128xf32>
    %164 = arith.addf %162, %163 : vector<8x128xf32>
    %165 = math.tanh %164 : vector<8x128xf32>
    %166 = vector.extract_strided_slice %165 {offsets = [0, 0], sizes = [8, 96], strides = [1, 1]} : vector<8x128xf32> to vector<8x96xf32>
    %cst_43 = arith.constant 5.000000e-01 : f32
    %167 = vector.broadcast %cst_43 : f32 to vector<8x96xf32>
    %168 = arith.mulf %167, %166 : vector<8x96xf32>
    %cst_44 = arith.constant 5.000000e-01 : f32
    %169 = vector.broadcast %cst_44 : f32 to vector<8x96xf32>
    %170 = arith.addf %168, %169 : vector<8x96xf32>
    %171 = vector.extract_strided_slice %170 {offsets = [0, 0], sizes = [8, 32], strides = [1, 1]} : vector<8x96xf32> to vector<8x32xf32>
    %172 = vector.extract_strided_slice %170 {offsets = [0, 32], sizes = [8, 32], strides = [1, 1]} : vector<8x96xf32> to vector<8x32xf32>
    %173 = vector.extract_strided_slice %170 {offsets = [0, 64], sizes = [8, 32], strides = [1, 1]} : vector<8x96xf32> to vector<8x32xf32>
    %174 = vector.extract_strided_slice %165 {offsets = [0, 96], sizes = [8, 32], strides = [1, 1]} : vector<8x128xf32> to vector<8x32xf32>
    %175 = arith.mulf %172, %161 : vector<8x32xf32>
    %176 = arith.mulf %171, %174 : vector<8x32xf32>
    %177 = arith.addf %175, %176 : vector<8x32xf32>
    %178 = math.tanh %177 : vector<8x32xf32>
    %179 = arith.mulf %173, %178 : vector<8x32xf32>
    %180 = vector.extract_strided_slice %159 {offsets = [8, 0], sizes = [8, 128], strides = [1, 1]} : vector<64x128xf32> to vector<8x128xf32>
    %cst_45 = arith.constant dense<0.000000e+00> : vector<8x128xf32>
    %181 = tpu.matmul %179, %155, %cst_45 {dimension_numbers = #tpu.dot_dimension_numbers<[1], [0], [0], [1], [0, 0, 1, 1], [], []>} : vector<8x32xf32>, vector<32x128xf32>, vector<8x128xf32> -> vector<8x128xf32>
    %182 = arith.addf %180, %181 : vector<8x128xf32>
    %183 = math.tanh %182 : vector<8x128xf32>
    %184 = vector.extract_strided_slice %183 {offsets = [0, 0], sizes = [8, 96], strides = [1, 1]} : vector<8x128xf32> to vector<8x96xf32>
    %cst_46 = arith.constant 5.000000e-01 : f32
    %185 = vector.broadcast %cst_46 : f32 to vector<8x96xf32>
    %186 = arith.mulf %185, %184 : vector<8x96xf32>
    %cst_47 = arith.constant 5.000000e-01 : f32
    %187 = vector.broadcast %cst_47 : f32 to vector<8x96xf32>
    %188 = arith.addf %186, %187 : vector<8x96xf32>
    %189 = vector.extract_strided_slice %188 {offsets = [0, 0], sizes = [8, 32], strides = [1, 1]} : vector<8x96xf32> to vector<8x32xf32>
    %190 = vector.extract_strided_slice %188 {offsets = [0, 32], sizes = [8, 32], strides = [1, 1]} : vector<8x96xf32> to vector<8x32xf32>
    %191 = vector.extract_strided_slice %188 {offsets = [0, 64], sizes = [8, 32], strides = [1, 1]} : vector<8x96xf32> to vector<8x32xf32>
    %192 = vector.extract_strided_slice %183 {offsets = [0, 96], sizes = [8, 32], strides = [1, 1]} : vector<8x128xf32> to vector<8x32xf32>
    %193 = arith.mulf %190, %177 : vector<8x32xf32>
    %194 = arith.mulf %189, %192 : vector<8x32xf32>
    %195 = arith.addf %193, %194 : vector<8x32xf32>
    %196 = math.tanh %195 : vector<8x32xf32>
    %197 = arith.mulf %191, %196 : vector<8x32xf32>
    %198 = vector.extract_strided_slice %159 {offsets = [16, 0], sizes = [8, 128], strides = [1, 1]} : vector<64x128xf32> to vector<8x128xf32>
    %cst_48 = arith.constant dense<0.000000e+00> : vector<8x128xf32>
    %199 = tpu.matmul %197, %155, %cst_48 {dimension_numbers = #tpu.dot_dimension_numbers<[1], [0], [0], [1], [0, 0, 1, 1], [], []>} : vector<8x32xf32>, vector<32x128xf32>, vector<8x128xf32> -> vector<8x128xf32>
    %200 = arith.addf %198, %199 : vector<8x128xf32>
    %201 = math.tanh %200 : vector<8x128xf32>
    %202 = vector.extract_strided_slice %201 {offsets = [0, 0], sizes = [8, 96], strides = [1, 1]} : vector<8x128xf32> to vector<8x96xf32>
    %cst_49 = arith.constant 5.000000e-01 : f32
    %203 = vector.broadcast %cst_49 : f32 to vector<8x96xf32>
    %204 = arith.mulf %203, %202 : vector<8x96xf32>
    %cst_50 = arith.constant 5.000000e-01 : f32
    %205 = vector.broadcast %cst_50 : f32 to vector<8x96xf32>
    %206 = arith.addf %204, %205 : vector<8x96xf32>
    %207 = vector.extract_strided_slice %206 {offsets = [0, 0], sizes = [8, 32], strides = [1, 1]} : vector<8x96xf32> to vector<8x32xf32>
    %208 = vector.extract_strided_slice %206 {offsets = [0, 32], sizes = [8, 32], strides = [1, 1]} : vector<8x96xf32> to vector<8x32xf32>
    %209 = vector.extract_strided_slice %206 {offsets = [0, 64], sizes = [8, 32], strides = [1, 1]} : vector<8x96xf32> to vector<8x32xf32>
    %210 = vector.extract_strided_slice %201 {offsets = [0, 96], sizes = [8, 32], strides = [1, 1]} : vector<8x128xf32> to vector<8x32xf32>
    %211 = arith.mulf %208, %195 : vector<8x32xf32>
    %212 = arith.mulf %207, %210 : vector<8x32xf32>
    %213 = arith.addf %211, %212 : vector<8x32xf32>
    %214 = math.tanh %213 : vector<8x32xf32>
    %215 = arith.mulf %209, %214 : vector<8x32xf32>
    %216 = vector.extract_strided_slice %159 {offsets = [24, 0], sizes = [8, 128], strides = [1, 1]} : vector<64x128xf32> to vector<8x128xf32>
    %cst_51 = arith.constant dense<0.000000e+00> : vector<8x128xf32>
    %217 = tpu.matmul %215, %155, %cst_51 {dimension_numbers = #tpu.dot_dimension_numbers<[1], [0], [0], [1], [0, 0, 1, 1], [], []>} : vector<8x32xf32>, vector<32x128xf32>, vector<8x128xf32> -> vector<8x128xf32>
    %218 = arith.addf %216, %217 : vector<8x128xf32>
    %219 = math.tanh %218 : vector<8x128xf32>
    %220 = vector.extract_strided_slice %219 {offsets = [0, 0], sizes = [8, 96], strides = [1, 1]} : vector<8x128xf32> to vector<8x96xf32>
    %cst_52 = arith.constant 5.000000e-01 : f32
    %221 = vector.broadcast %cst_52 : f32 to vector<8x96xf32>
    %222 = arith.mulf %221, %220 : vector<8x96xf32>
    %cst_53 = arith.constant 5.000000e-01 : f32
    %223 = vector.broadcast %cst_53 : f32 to vector<8x96xf32>
    %224 = arith.addf %222, %223 : vector<8x96xf32>
    %225 = vector.extract_strided_slice %224 {offsets = [0, 0], sizes = [8, 32], strides = [1, 1]} : vector<8x96xf32> to vector<8x32xf32>
    %226 = vector.extract_strided_slice %224 {offsets = [0, 32], sizes = [8, 32], strides = [1, 1]} : vector<8x96xf32> to vector<8x32xf32>
    %227 = vector.extract_strided_slice %224 {offsets = [0, 64], sizes = [8, 32], strides = [1, 1]} : vector<8x96xf32> to vector<8x32xf32>
    %228 = vector.extract_strided_slice %219 {offsets = [0, 96], sizes = [8, 32], strides = [1, 1]} : vector<8x128xf32> to vector<8x32xf32>
    %229 = arith.mulf %226, %213 : vector<8x32xf32>
    %230 = arith.mulf %225, %228 : vector<8x32xf32>
    %231 = arith.addf %229, %230 : vector<8x32xf32>
    %232 = math.tanh %231 : vector<8x32xf32>
    %233 = arith.mulf %227, %232 : vector<8x32xf32>
    %234 = vector.extract_strided_slice %159 {offsets = [32, 0], sizes = [8, 128], strides = [1, 1]} : vector<64x128xf32> to vector<8x128xf32>
    %cst_54 = arith.constant dense<0.000000e+00> : vector<8x128xf32>
    %235 = tpu.matmul %233, %155, %cst_54 {dimension_numbers = #tpu.dot_dimension_numbers<[1], [0], [0], [1], [0, 0, 1, 1], [], []>} : vector<8x32xf32>, vector<32x128xf32>, vector<8x128xf32> -> vector<8x128xf32>
    %236 = arith.addf %234, %235 : vector<8x128xf32>
    %237 = math.tanh %236 : vector<8x128xf32>
    %238 = vector.extract_strided_slice %237 {offsets = [0, 0], sizes = [8, 96], strides = [1, 1]} : vector<8x128xf32> to vector<8x96xf32>
    %cst_55 = arith.constant 5.000000e-01 : f32
    %239 = vector.broadcast %cst_55 : f32 to vector<8x96xf32>
    %240 = arith.mulf %239, %238 : vector<8x96xf32>
    %cst_56 = arith.constant 5.000000e-01 : f32
    %241 = vector.broadcast %cst_56 : f32 to vector<8x96xf32>
    %242 = arith.addf %240, %241 : vector<8x96xf32>
    %243 = vector.extract_strided_slice %242 {offsets = [0, 0], sizes = [8, 32], strides = [1, 1]} : vector<8x96xf32> to vector<8x32xf32>
    %244 = vector.extract_strided_slice %242 {offsets = [0, 32], sizes = [8, 32], strides = [1, 1]} : vector<8x96xf32> to vector<8x32xf32>
    %245 = vector.extract_strided_slice %242 {offsets = [0, 64], sizes = [8, 32], strides = [1, 1]} : vector<8x96xf32> to vector<8x32xf32>
    %246 = vector.extract_strided_slice %237 {offsets = [0, 96], sizes = [8, 32], strides = [1, 1]} : vector<8x128xf32> to vector<8x32xf32>
    %247 = arith.mulf %244, %231 : vector<8x32xf32>
    %248 = arith.mulf %243, %246 : vector<8x32xf32>
    %249 = arith.addf %247, %248 : vector<8x32xf32>
    %250 = math.tanh %249 : vector<8x32xf32>
    %251 = arith.mulf %245, %250 : vector<8x32xf32>
    %252 = vector.extract_strided_slice %159 {offsets = [40, 0], sizes = [8, 128], strides = [1, 1]} : vector<64x128xf32> to vector<8x128xf32>
    %cst_57 = arith.constant dense<0.000000e+00> : vector<8x128xf32>
    %253 = tpu.matmul %251, %155, %cst_57 {dimension_numbers = #tpu.dot_dimension_numbers<[1], [0], [0], [1], [0, 0, 1, 1], [], []>} : vector<8x32xf32>, vector<32x128xf32>, vector<8x128xf32> -> vector<8x128xf32>
    %254 = arith.addf %252, %253 : vector<8x128xf32>
    %255 = math.tanh %254 : vector<8x128xf32>
    %256 = vector.extract_strided_slice %255 {offsets = [0, 0], sizes = [8, 96], strides = [1, 1]} : vector<8x128xf32> to vector<8x96xf32>
    %cst_58 = arith.constant 5.000000e-01 : f32
    %257 = vector.broadcast %cst_58 : f32 to vector<8x96xf32>
    %258 = arith.mulf %257, %256 : vector<8x96xf32>
    %cst_59 = arith.constant 5.000000e-01 : f32
    %259 = vector.broadcast %cst_59 : f32 to vector<8x96xf32>
    %260 = arith.addf %258, %259 : vector<8x96xf32>
    %261 = vector.extract_strided_slice %260 {offsets = [0, 0], sizes = [8, 32], strides = [1, 1]} : vector<8x96xf32> to vector<8x32xf32>
    %262 = vector.extract_strided_slice %260 {offsets = [0, 32], sizes = [8, 32], strides = [1, 1]} : vector<8x96xf32> to vector<8x32xf32>
    %263 = vector.extract_strided_slice %260 {offsets = [0, 64], sizes = [8, 32], strides = [1, 1]} : vector<8x96xf32> to vector<8x32xf32>
    %264 = vector.extract_strided_slice %255 {offsets = [0, 96], sizes = [8, 32], strides = [1, 1]} : vector<8x128xf32> to vector<8x32xf32>
    %265 = arith.mulf %262, %249 : vector<8x32xf32>
    %266 = arith.mulf %261, %264 : vector<8x32xf32>
    %267 = arith.addf %265, %266 : vector<8x32xf32>
    %268 = math.tanh %267 : vector<8x32xf32>
    %269 = arith.mulf %263, %268 : vector<8x32xf32>
    %270 = vector.extract_strided_slice %159 {offsets = [48, 0], sizes = [8, 128], strides = [1, 1]} : vector<64x128xf32> to vector<8x128xf32>
    %cst_60 = arith.constant dense<0.000000e+00> : vector<8x128xf32>
    %271 = tpu.matmul %269, %155, %cst_60 {dimension_numbers = #tpu.dot_dimension_numbers<[1], [0], [0], [1], [0, 0, 1, 1], [], []>} : vector<8x32xf32>, vector<32x128xf32>, vector<8x128xf32> -> vector<8x128xf32>
    %272 = arith.addf %270, %271 : vector<8x128xf32>
    %273 = math.tanh %272 : vector<8x128xf32>
    %274 = vector.extract_strided_slice %273 {offsets = [0, 0], sizes = [8, 96], strides = [1, 1]} : vector<8x128xf32> to vector<8x96xf32>
    %cst_61 = arith.constant 5.000000e-01 : f32
    %275 = vector.broadcast %cst_61 : f32 to vector<8x96xf32>
    %276 = arith.mulf %275, %274 : vector<8x96xf32>
    %cst_62 = arith.constant 5.000000e-01 : f32
    %277 = vector.broadcast %cst_62 : f32 to vector<8x96xf32>
    %278 = arith.addf %276, %277 : vector<8x96xf32>
    %279 = vector.extract_strided_slice %278 {offsets = [0, 0], sizes = [8, 32], strides = [1, 1]} : vector<8x96xf32> to vector<8x32xf32>
    %280 = vector.extract_strided_slice %278 {offsets = [0, 32], sizes = [8, 32], strides = [1, 1]} : vector<8x96xf32> to vector<8x32xf32>
    %281 = vector.extract_strided_slice %278 {offsets = [0, 64], sizes = [8, 32], strides = [1, 1]} : vector<8x96xf32> to vector<8x32xf32>
    %282 = vector.extract_strided_slice %273 {offsets = [0, 96], sizes = [8, 32], strides = [1, 1]} : vector<8x128xf32> to vector<8x32xf32>
    %283 = arith.mulf %280, %267 : vector<8x32xf32>
    %284 = arith.mulf %279, %282 : vector<8x32xf32>
    %285 = arith.addf %283, %284 : vector<8x32xf32>
    %286 = math.tanh %285 : vector<8x32xf32>
    %287 = arith.mulf %281, %286 : vector<8x32xf32>
    %288 = vector.extract_strided_slice %159 {offsets = [56, 0], sizes = [8, 128], strides = [1, 1]} : vector<64x128xf32> to vector<8x128xf32>
    %cst_63 = arith.constant dense<0.000000e+00> : vector<8x128xf32>
    %289 = tpu.matmul %287, %155, %cst_63 {dimension_numbers = #tpu.dot_dimension_numbers<[1], [0], [0], [1], [0, 0, 1, 1], [], []>} : vector<8x32xf32>, vector<32x128xf32>, vector<8x128xf32> -> vector<8x128xf32>
    %290 = arith.addf %288, %289 : vector<8x128xf32>
    %291 = math.tanh %290 : vector<8x128xf32>
    %292 = vector.extract_strided_slice %291 {offsets = [0, 0], sizes = [8, 96], strides = [1, 1]} : vector<8x128xf32> to vector<8x96xf32>
    %cst_64 = arith.constant 5.000000e-01 : f32
    %293 = vector.broadcast %cst_64 : f32 to vector<8x96xf32>
    %294 = arith.mulf %293, %292 : vector<8x96xf32>
    %cst_65 = arith.constant 5.000000e-01 : f32
    %295 = vector.broadcast %cst_65 : f32 to vector<8x96xf32>
    %296 = arith.addf %294, %295 : vector<8x96xf32>
    %297 = vector.extract_strided_slice %296 {offsets = [0, 0], sizes = [8, 32], strides = [1, 1]} : vector<8x96xf32> to vector<8x32xf32>
    %298 = vector.extract_strided_slice %296 {offsets = [0, 32], sizes = [8, 32], strides = [1, 1]} : vector<8x96xf32> to vector<8x32xf32>
    %299 = vector.extract_strided_slice %296 {offsets = [0, 64], sizes = [8, 32], strides = [1, 1]} : vector<8x96xf32> to vector<8x32xf32>
    %300 = vector.extract_strided_slice %291 {offsets = [0, 96], sizes = [8, 32], strides = [1, 1]} : vector<8x128xf32> to vector<8x32xf32>
    %301 = arith.mulf %298, %285 : vector<8x32xf32>
    %302 = arith.mulf %297, %300 : vector<8x32xf32>
    %303 = arith.addf %301, %302 : vector<8x32xf32>
    %304 = math.tanh %303 : vector<8x32xf32>
    %305 = arith.mulf %299, %304 : vector<8x32xf32>
    %306 = tpu.concatenate %179, %197, %215, %233, %251, %269, %287, %305 in 0 : vector<8x32xf32>, vector<8x32xf32>, vector<8x32xf32>, vector<8x32xf32>, vector<8x32xf32>, vector<8x32xf32>, vector<8x32xf32>, vector<8x32xf32> -> vector<64x32xf32>
    %c0_66 = arith.constant 0 : index
    %c0_67 = arith.constant 0 : index
    %307 = vector.load %arg7[%c0_66, %c0_67] : memref<32x8xf32, #tpu.memory_space<vmem>>, vector<32x8xf32>
    %c0_68 = arith.constant 0 : index
    %c0_69 = arith.constant 0 : index
    %308 = vector.load %arg8[%c0_68, %c0_69] : memref<1x8xf32, #tpu.memory_space<vmem>>, vector<1x8xf32>
    %cst_70 = arith.constant dense<0.000000e+00> : vector<64x8xf32>
    %309 = tpu.matmul %306, %307, %cst_70 {dimension_numbers = #tpu.dot_dimension_numbers<[1], [0], [0], [1], [0, 0, 1, 1], [], []>} : vector<64x32xf32>, vector<32x8xf32>, vector<64x8xf32> -> vector<64x8xf32>
    %310 = vector.broadcast %308 : vector<1x8xf32> to vector<64x8xf32>
    %311 = arith.addf %309, %310 : vector<64x8xf32>
    %c0_71 = arith.constant 0 : index
    %c0_72 = arith.constant 0 : index
    %312 = vector.load %arg9[%c0_71, %c0_72] : memref<64x8xf32, #tpu.memory_space<vmem>>, vector<64x8xf32>
    tpu.vector_store %arg9[%c0_71, %c0_72], %311 {strides = array<i32>} : memref<64x8xf32, #tpu.memory_space<vmem>>, vector<64x8xf32>,
    return
  }
}

</mosaic_0001>

<llo_original>
// kernel: my_lstm_model_forward.1
$region0: #{my_lstm_model_forward.1}
  #allocation0 [shape = 'u32[]', space=smem, size = 0x4, offset = 0x4, fixed_abs, tag = 'smem constant byte address 0x4 - core index']
  #allocation1 [shape = 'u32[144,128]{1,0:T(1,128)}', space=vmem, size = 0x12000, scoped, tag = 'internal scratch']
  %s0 = inlined_call_operand.vmem [shape: f32[64,16], index: 0, kind: input, shape index: {}]
  %s1 = inlined_call_operand.vmem [shape: f32[16,128], index: 1, kind: input, shape index: {}]
  %s2 = inlined_call_operand.vmem [shape: f32[32,128], index: 2, kind: input, shape index: {}]
  %s3 = inlined_call_operand.vmem [shape: f32[1,128], index: 3, kind: input, shape index: {}]
  %s4 = inlined_call_operand.vmem [shape: f32[32,128], index: 4, kind: input, shape index: {}]
  %s5 = inlined_call_operand.vmem [shape: f32[32,128], index: 5, kind: input, shape index: {}]
  %s6 = inlined_call_operand.vmem [shape: f32[1,128], index: 6, kind: input, shape index: {}]
  %s7 = inlined_call_operand.vmem [shape: f32[32,8], index: 7, kind: input, shape index: {}]
  %s8 = inlined_call_operand.vmem [shape: f32[1,8], index: 8, kind: input, shape index: {}]
  %s9 = inlined_call_operand.vmem [shape: f32[64,8], index: 9, kind: output, shape index: {}]
  %s10 = sld [smem:[#allocation0]]
  $region46: #{my_lstm_model_forward.1} parent=0
    _
  %s12 = ssub.s32 1, %s10
  %s13 = scalar_select 0, %s12, %s10
  // Predicated region
  $region2: #{my_lstm_model_forward.1} parent=0 // pred_check
    _
  $region3: #{my_lstm_model_forward.1} parent=0 // pred_check_branch
    %15 = sbr.rel (0) target = $region5
  $region4: #{my_lstm_model_forward.1} parent=0 // pred_region
    _
  $region5: #{my_lstm_model_forward.1} parent=0 // pred_fallthru
    _
  // Predicated region
  $region6: #{my_lstm_model_forward.1} parent=0 // pred_check
    _
  $region7: #{my_lstm_model_forward.1} parent=0 // pred_check_branch
    %17 = sbr.rel (0) target = $region9
  $region8: #{my_lstm_model_forward.1} parent=0 // pred_region
    _
  $region9: #{my_lstm_model_forward.1} parent=0 // pred_fallthru
    _
  // Predicated region
  $region10: #{my_lstm_model_forward.1} parent=0 // pred_check
    _
  $region11: #{my_lstm_model_forward.1} parent=0 // pred_check_branch
    %19 = sbr.rel (0) target = $region13
  $region12: #{my_lstm_model_forward.1} parent=0 // pred_region
    _
  $region13: #{my_lstm_model_forward.1} parent=0 // pred_fallthru
    _
  // Predicated region
  $region14: #{my_lstm_model_forward.1} parent=0 // pred_check
    _
  $region15: #{my_lstm_model_forward.1} parent=0 // pred_check_branch
    %21 = sbr.rel (0) target = $region17
  $region16: #{my_lstm_model_forward.1} parent=0 // pred_region
    _
  $region17: #{my_lstm_model_forward.1} parent=0 // pred_fallthru
    _
  // Predicated region
  $region18: #{my_lstm_model_forward.1} parent=0 // pred_check
    _
  $region19: #{my_lstm_model_forward.1} parent=0 // pred_check_branch
    %23 = sbr.rel (0) target = $region21
  $region20: #{my_lstm_model_forward.1} parent=0 // pred_region
    _
  $region21: #{my_lstm_model_forward.1} parent=0 // pred_fallthru
    _
  // Predicated region
  $region22: #{my_lstm_model_forward.1} parent=0 // pred_check
    _
  $region23: #{my_lstm_model_forward.1} parent=0 // pred_check_branch
    %25 = sbr.rel (0) target = $region25
  $region24: #{my_lstm_model_forward.1} parent=0 // pred_region
    _
  $region25: #{my_lstm_model_forward.1} parent=0 // pred_fallthru
    _
  // Predicated region
  $region26: #{my_lstm_model_forward.1} parent=0 // pred_check
    _
  $region27: #{my_lstm_model_forward.1} parent=0 // pred_check_branch
    %27 = sbr.rel (0) target = $region29
  $region28: #{my_lstm_model_forward.1} parent=0 // pred_region
    _
  $region29: #{my_lstm_model_forward.1} parent=0 // pred_fallthru
    _
  // Predicated region
  $region30: #{my_lstm_model_forward.1} parent=0 // pred_check
    _
  $region31: #{my_lstm_model_forward.1} parent=0 // pred_check_branch
    %29 = sbr.rel (0) target = $region33
  $region32: #{my_lstm_model_forward.1} parent=0 // pred_region
    _
  $region33: #{my_lstm_model_forward.1} parent=0 // pred_fallthru
    _
  // Predicated region
  $region34: #{my_lstm_model_forward.1} parent=0 // pred_check
    _
  $region35: #{my_lstm_model_forward.1} parent=0 // pred_check_branch
    %31 = sbr.rel (0) target = $region37
  $region36: #{my_lstm_model_forward.1} parent=0 // pred_region
    _
  $region37: #{my_lstm_model_forward.1} parent=0 // pred_fallthru
    _
  %v32 = vld [vmem:[%s0] sm:$0xff]
  %v33 = vld [vmem:[%s0 + $0x8] sm:$0xff]
  %v34 = vld [vmem:[%s0 + $0x10] sm:$0xff]
  %v35 = vld [vmem:[%s0 + $0x18] sm:$0xff]
  %v36 = vld [vmem:[%s0 + $0x20] sm:$0xff]
  %v37 = vld [vmem:[%s0 + $0x28] sm:$0xff]
  %v38 = vld [vmem:[%s0 + $0x30] sm:$0xff]
  %v39 = vld [vmem:[%s0 + $0x38] sm:$0xff]
  %v40 = vld [vmem:[%s1] sm:$0xff]
  %v41 = vld [vmem:[%s1 + $0x8] sm:$0xff]
  %v42 = vld [vmem:[%s2] sm:$0xff]
  %v43 = vld [vmem:[%s2 + $0x8] sm:$0xff]
  %v44 = vld [vmem:[%s2 + $0x10] sm:$0xff]
  %v45 = vld [vmem:[%s2 + $0x18] sm:$0xff]
  %v46 = vld [vmem:[%s3] sm:$0x1]
  %v48 = vlaneseq
  %v49 = vshrl.u32 %v48, 7
  %v50 = vsub.s32 0, %v49
  %v51 = vrot.slane %v46, %v50
  %vm53 = vcmask 130048
  %v55 = vsel %vm53, %v32, 0
  %v58 = vsel %vm53, %v33, 0
  %v61 = vsel %vm53, %v34, 0
  %v64 = vsel %vm53, %v35, 0
  %v67 = vsel %vm53, %v36, 0
  %v70 = vsel %vm53, %v37, 0
  %v73 = vsel %vm53, %v38, 0
  %v76 = vsel %vm53, %v39, 0
  %78 = vmatprep.subr.mxu0 0.0
  %79 = vmatpush1.msra.mxu0 %v40
  %80 = vmatprep.subr.mxu0 0.0
  %81 = vmatpush1.msra.mxu0 %v41
  %82 = vmatprep.subr.mxu0 0.0
  %83 = vmatpush1.msra.mxu0 0.0
  %84 = vmatprep.subr.mxu0 0.0
  %85 = vmatpush1.msra.mxu0 0.0
  %86 = vmatprep.subr.mxu0 0.0
  %87 = vmatpush1.msra.mxu0 0.0
  %88 = vmatprep.subr.mxu0 0.0
  %89 = vmatpush1.msra.mxu0 0.0
  %90 = vmatprep.subr.mxu0 0.0
  %91 = vmatpush1.msra.mxu0 0.0
  %92 = vmatprep.subr.mxu0 0.0
  %93 = vmatpush1.msra.mxu0 0.0
  %94 = vmatprep.subr.mxu0 0.0
  %95 = vmatpush1.msra.mxu0 0.0
  %96 = vmatprep.subr.mxu0 0.0
  %97 = vmatpush1.msra.mxu0 0.0
  %98 = vmatprep.subr.mxu0 0.0
  %99 = vmatpush1.msra.mxu0 0.0
  %100 = vmatprep.subr.mxu0 0.0
  %101 = vmatpush1.msra.mxu0 0.0
  %102 = vmatprep.subr.mxu0 0.0
  %103 = vmatpush1.msra.mxu0 0.0
  %104 = vmatprep.subr.mxu0 0.0
  %105 = vmatpush1.msra.mxu0 0.0
  %106 = vmatprep.subr.mxu0 0.0
  %107 = vmatpush1.msra.mxu0 0.0
  %108 = vmatprep.subr.mxu0 0.0
  %109 = vmatpush1.msra.mxu0 0.0
  %110 = vmatprep.subr.mxu0 0.0
  %111 = vmatpush1.msra.mxu0 0.0
  %112 = vmatprep.subr.mxu0 0.0
  %113 = vmatpush1.msra.mxu0 0.0
  %114 = vmatprep.subr.mxu0 0.0
  %115 = vmatpush1.msra.mxu0 0.0
  %116 = vmatprep.subr.mxu0 0.0
  %117 = vmatpush1.msra.mxu0 0.0
  %118 = vmatprep.subr.mxu0 0.0
  %119 = vmatpush1.msra.mxu0 0.0
  %120 = vmatprep.subr.mxu0 0.0
  %121 = vmatpush1.msra.mxu0 0.0
  %122 = vmatprep.subr.mxu0 0.0
  %123 = vmatpush1.msra.mxu0 0.0
  %124 = vmatprep.subr.mxu0 0.0
  %125 = vmatpush1.msra.mxu0 0.0
  %126 = vmatprep.subr.mxu0 0.0
  %127 = vmatpush1.msra.mxu0 0.0
  %128 = vmatprep.subr.mxu0 0.0
  %129 = vmatpush1.msra.mxu0 0.0
  %130 = vmatprep.subr.mxu0 0.0
  %131 = vmatpush1.msra.mxu0 0.0
  %132 = vmatprep.subr.mxu0 0.0
  %133 = vmatpush1.msra.mxu0 0.0
  %134 = vmatprep.subr.mxu0 0.0
  %135 = vmatpush1.msra.mxu0 0.0
  %136 = vmatprep.subr.mxu0 0.0
  %137 = vmatpush1.msra.mxu0 0.0
  %138 = vmatprep.subr.mxu0 0.0
  %139 = vmatpush1.msra.mxu0 0.0
  %140 = vmatprep.subr.mxu0 0.0
  %141 = vmatpush1.msra.mxu0 0.0
  %142 = vmatprep.mubr.f32.mxu0 0.0
  %143 = vmatmul.mubr.f32.gmra.mrb[0].mxu0 %v55
  %v144 = vpop.f32.mrb[0].mxu0
  %v145 = vadd.f32 %v51, %v144
  %v146 = vpop.f32.mrb[0].mxu0
  %147 = vmatprep.mubr.f32.mxu0 0.0
  %148 = vmatmul.mubr.f32.gmra.mrb[0].mxu0 %v58
  %v149 = vpop.f32.mrb[0].mxu0
  %v150 = vadd.f32 %v51, %v149
  %v151 = vpop.f32.mrb[0].mxu0
  %152 = vmatprep.mubr.f32.mxu0 0.0
  %153 = vmatmul.mubr.f32.gmra.mrb[0].mxu0 %v61
  %v154 = vpop.f32.mrb[0].mxu0
  %v155 = vadd.f32 %v51, %v154
  %v156 = vpop.f32.mrb[0].mxu0
  %157 = vmatprep.mubr.f32.mxu0 0.0
  %158 = vmatmul.mubr.f32.gmra.mrb[0].mxu0 %v64
  %v159 = vpop.f32.mrb[0].mxu0
  %v160 = vadd.f32 %v51, %v159
  %v161 = vpop.f32.mrb[0].mxu0
  %162 = vmatprep.mubr.f32.mxu0 0.0
  %163 = vmatmul.mubr.f32.gmra.mrb[0].mxu0 %v67
  %v164 = vpop.f32.mrb[0].mxu0
  %v165 = vadd.f32 %v51, %v164
  %v166 = vpop.f32.mrb[0].mxu0
  %167 = vmatprep.mubr.f32.mxu0 0.0
  %168 = vmatmul.mubr.f32.gmra.mrb[0].mxu0 %v70
  %v169 = vpop.f32.mrb[0].mxu0
  %v170 = vadd.f32 %v51, %v169
  %v171 = vpop.f32.mrb[0].mxu0
  %172 = vmatprep.mubr.f32.mxu0 0.0
  %173 = vmatmul.mubr.f32.gmra.mrb[0].mxu0 %v73
  %v174 = vpop.f32.mrb[0].mxu0
  %v175 = vadd.f32 %v51, %v174
  %v176 = vpop.f32.mrb[0].mxu0
  %177 = vmatprep.mubr.f32.mxu0 0.0
  %178 = vmatmul.mubr.f32.gmra.mrb[0].mxu0 %v76
  %v179 = vpop.f32.mrb[0].mxu0
  %v180 = vadd.f32 %v51, %v179
  %v181 = vpop.f32.mrb[0].mxu0
  %182 = vdwg.mxu0
  %vm183 = vcmask 261120
  %v185 = vsel %vm183, 0.0, 0
  %187 = vmatprep.subr.mxu0 0.0
  %188 = vmatpush1.msra.mxu0 %v42
  %189 = vmatprep.subr.mxu0 0.0
  %190 = vmatpush1.msra.mxu0 %v43
  %191 = vmatprep.subr.mxu0 0.0
  %192 = vmatpush1.msra.mxu0 %v44
  %193 = vmatprep.subr.mxu0 0.0
  %194 = vmatpush1.msra.mxu0 %v45
  %195 = vmatprep.subr.mxu0 0.0
  %196 = vmatpush1.msra.mxu0 0.0
  %197 = vmatprep.subr.mxu0 0.0
  %198 = vmatpush1.msra.mxu0 0.0
  %199 = vmatprep.subr.mxu0 0.0
  %200 = vmatpush1.msra.mxu0 0.0
  %201 = vmatprep.subr.mxu0 0.0
  %202 = vmatpush1.msra.mxu0 0.0
  %203 = vmatprep.subr.mxu0 0.0
  %204 = vmatpush1.msra.mxu0 0.0
  %205 = vmatprep.subr.mxu0 0.0
  %206 = vmatpush1.msra.mxu0 0.0
  %207 = vmatprep.subr.mxu0 0.0
  %208 = vmatpush1.msra.mxu0 0.0
  %209 = vmatprep.subr.mxu0 0.0
  %210 = vmatpush1.msra.mxu0 0.0
  %211 = vmatprep.subr.mxu0 0.0
  %212 = vmatpush1.msra.mxu0 0.0
  %213 = vmatprep.subr.mxu0 0.0
  %214 = vmatpush1.msra.mxu0 0.0
  %215 = vmatprep.subr.mxu0 0.0
  %216 = vmatpush1.msra.mxu0 0.0
  %217 = vmatprep.subr.mxu0 0.0
  %218 = vmatpush1.msra.mxu0 0.0
  %219 = vmatprep.subr.mxu0 0.0
  %220 = vmatpush1.msra.mxu0 0.0
  %221 = vmatprep.subr.mxu0 0.0
  %222 = vmatpush1.msra.mxu0 0.0
  %223 = vmatprep.subr.mxu0 0.0
  %224 = vmatpush1.msra.mxu0 0.0
  %225 = vmatprep.subr.mxu0 0.0
  %226 = vmatpush1.msra.mxu0 0.0
  %227 = vmatprep.subr.mxu0 0.0
  %228 = vmatpush1.msra.mxu0 0.0
  %229 = vmatprep.subr.mxu0 0.0
  %230 = vmatpush1.msra.mxu0 0.0
  %231 = vmatprep.subr.mxu0 0.0
  %232 = vmatpush1.msra.mxu0 0.0
  %233 = vmatprep.subr.mxu0 0.0
  %234 = vmatpush1.msra.mxu0 0.0
  %235 = vmatprep.subr.mxu0 0.0
  %236 = vmatpush1.msra.mxu0 0.0
  %237 = vmatprep.subr.mxu0 0.0
  %238 = vmatpush1.msra.mxu0 0.0
  %239 = vmatprep.subr.mxu0 0.0
  %240 = vmatpush1.msra.mxu0 0.0
  %241 = vmatprep.subr.mxu0 0.0
  %242 = vmatpush1.msra.mxu0 0.0
  %243 = vmatprep.subr.mxu0 0.0
  %244 = vmatpush1.msra.mxu0 0.0
  %245 = vmatprep.subr.mxu0 0.0
  %246 = vmatpush1.msra.mxu0 0.0
  %247 = vmatprep.subr.mxu0 0.0
  %248 = vmatpush1.msra.mxu0 0.0
  %249 = vmatprep.subr.mxu0 0.0
  %250 = vmatpush1.msra.mxu0 0.0
  %251 = vmatprep.mubr.f32.mxu0 0.0
  %252 = vmatmul.mubr.f32.gmra.mrb[0].mxu0 %v185
  %v253 = vpop.f32.mrb[0].mxu0
  %v254 = vadd.f32 0.0, %v253
  %v255 = vpop.f32.mrb[0].mxu0
  %256 = vdwg.mxu0
  %v257 = vadd.f32 %v145, %v254
  %v258 = vtanh.pop %v257
  %v259 = vmul.f32 %v258, 0.5
  %v260 = vadd.f32 %v259, 0.5
  %v261 = vmul.f32 %v260, 0.0
  %263 = vrot.lane.b32.xlu0 %v258, 32
  %v264 = vpop.permute.xlu0 %263
  %v266 = vmul.f32 %v260, %v264
  %268 = vrot.lane.b32.xlu0 %v266, 32
  %v269 = vpop.permute.xlu0 %268
  %v271 = vadd.f32 %v261, %v269
  %v272 = vtanh.pop %v271
  %274 = vrot.lane.b32.xlu0 %v272, 32
  %v275 = vpop.permute.xlu0 %274
  %v277 = vmul.f32 %v260, %v275
  %279 = vrot.lane.b32.xlu0 %v277, 64
  %v280 = vpop.permute.xlu0 %279
  %v281 = vsel %vm183, %v280, 0
  %283 = vmatprep.subr.mxu0 0.0
  %284 = vmatpush1.msra.mxu0 %v42
  %285 = vmatprep.subr.mxu0 0.0
  %286 = vmatpush1.msra.mxu0 %v43
  %287 = vmatprep.subr.mxu0 0.0
  %288 = vmatpush1.msra.mxu0 %v44
  %289 = vmatprep.subr.mxu0 0.0
  %290 = vmatpush1.msra.mxu0 %v45
  %291 = vmatprep.subr.mxu0 0.0
  %292 = vmatpush1.msra.mxu0 0.0
  %293 = vmatprep.subr.mxu0 0.0
  %294 = vmatpush1.msra.mxu0 0.0
  %295 = vmatprep.subr.mxu0 0.0
  %296 = vmatpush1.msra.mxu0 0.0
  %297 = vmatprep.subr.mxu0 0.0
  %298 = vmatpush1.msra.mxu0 0.0
  %299 = vmatprep.subr.mxu0 0.0
  %300 = vmatpush1.msra.mxu0 0.0
  %301 = vmatprep.subr.mxu0 0.0
  %302 = vmatpush1.msra.mxu0 0.0
  %303 = vmatprep.subr.mxu0 0.0
  %304 = vmatpush1.msra.mxu0 0.0
  %305 = vmatprep.subr.mxu0 0.0
  %306 = vmatpush1.msra.mxu0 0.0
  %307 = vmatprep.subr.mxu0 0.0
  %308 = vmatpush1.msra.mxu0 0.0
  %309 = vmatprep.subr.mxu0 0.0
  %310 = vmatpush1.msra.mxu0 0.0
  %311 = vmatprep.subr.mxu0 0.0
  %312 = vmatpush1.msra.mxu0 0.0
  %313 = vmatprep.subr.mxu0 0.0
  %314 = vmatpush1.msra.mxu0 0.0
  %315 = vmatprep.subr.mxu0 0.0
  %316 = vmatpush1.msra.mxu0 0.0
  %317 = vmatprep.subr.mxu0 0.0
  %318 = vmatpush1.msra.mxu0 0.0
  %319 = vmatprep.subr.mxu0 0.0
  %320 = vmatpush1.msra.mxu0 0.0
  %321 = vmatprep.subr.mxu0 0.0
  %322 = vmatpush1.msra.mxu0 0.0
  %323 = vmatprep.subr.mxu0 0.0
  %324 = vmatpush1.msra.mxu0 0.0
  %325 = vmatprep.subr.mxu0 0.0
  %326 = vmatpush1.msra.mxu0 0.0
  %327 = vmatprep.subr.mxu0 0.0
  %328 = vmatpush1.msra.mxu0 0.0
  %329 = vmatprep.subr.mxu0 0.0
  %330 = vmatpush1.msra.mxu0 0.0
  %331 = vmatprep.subr.mxu0 0.0
  %332 = vmatpush1.msra.mxu0 0.0
  %333 = vmatprep.subr.mxu0 0.0
  %334 = vmatpush1.msra.mxu0 0.0
  %335 = vmatprep.subr.mxu0 0.0
  %336 = vmatpush1.msra.mxu0 0.0
  %337 = vmatprep.subr.mxu0 0.0
  %338 = vmatpush1.msra.mxu0 0.0
  %339 = vmatprep.subr.mxu0 0.0
  %340 = vmatpush1.msra.mxu0 0.0
  %341 = vmatprep.subr.mxu0 0.0
  %342 = vmatpush1.msra.mxu0 0.0
  %343 = vmatprep.subr.mxu0 0.0
  %344 = vmatpush1.msra.mxu0 0.0
  %345 = vmatprep.subr.mxu0 0.0
  %346 = vmatpush1.msra.mxu0 0.0
  %347 = vmatprep.mubr.f32.mxu0 0.0
  %348 = vmatmul.mubr.f32.gmra.mrb[0].mxu0 %v281
  %v349 = vpop.f32.mrb[0].mxu0
  %v350 = vadd.f32 0.0, %v349
  %v351 = vpop.f32.mrb[0].mxu0
  %352 = vdwg.mxu0
  %v353 = vadd.f32 %v150, %v350
  %v354 = vtanh.pop %v353
  %v355 = vmul.f32 %v354, 0.5
  %v356 = vadd.f32 %v355, 0.5
  %v357 = vmul.f32 %v356, %v271
  %359 = vrot.lane.b32.xlu0 %v354, 32
  %v360 = vpop.permute.xlu0 %359
  %v362 = vmul.f32 %v356, %v360
  %364 = vrot.lane.b32.xlu0 %v362, 32
  %v365 = vpop.permute.xlu0 %364
  %v367 = vadd.f32 %v357, %v365
  %v368 = vtanh.pop %v367
  %370 = vrot.lane.b32.xlu0 %v368, 32
  %v371 = vpop.permute.xlu0 %370
  %v373 = vmul.f32 %v356, %v371
  %375 = vrot.lane.b32.xlu0 %v373, 64
  %v376 = vpop.permute.xlu0 %375
  %v377 = vsel %vm183, %v376, 0
  %379 = vmatprep.subr.mxu0 0.0
  %380 = vmatpush1.msra.mxu0 %v42
  %381 = vmatprep.subr.mxu0 0.0
  %382 = vmatpush1.msra.mxu0 %v43
  %383 = vmatprep.subr.mxu0 0.0
  %384 = vmatpush1.msra.mxu0 %v44
  %385 = vmatprep.subr.mxu0 0.0
  %386 = vmatpush1.msra.mxu0 %v45
  %387 = vmatprep.subr.mxu0 0.0
  %388 = vmatpush1.msra.mxu0 0.0
  %389 = vmatprep.subr.mxu0 0.0
  %390 = vmatpush1.msra.mxu0 0.0
  %391 = vmatprep.subr.mxu0 0.0
  %392 = vmatpush1.msra.mxu0 0.0
  %393 = vmatprep.subr.mxu0 0.0
  %394 = vmatpush1.msra.mxu0 0.0
  %395 = vmatprep.subr.mxu0 0.0
  %396 = vmatpush1.msra.mxu0 0.0
  %397 = vmatprep.subr.mxu0 0.0
  %398 = vmatpush1.msra.mxu0 0.0
  %399 = vmatprep.subr.mxu0 0.0
  %400 = vmatpush1.msra.mxu0 0.0
  %401 = vmatprep.subr.mxu0 0.0
  %402 = vmatpush1.msra.mxu0 0.0
  %403 = vmatprep.subr.mxu0 0.0
  %404 = vmatpush1.msra.mxu0 0.0
  %405 = vmatprep.subr.mxu0 0.0
  %406 = vmatpush1.msra.mxu0 0.0
  %407 = vmatprep.subr.mxu0 0.0
  %408 = vmatpush1.msra.mxu0 0.0
  %409 = vmatprep.subr.mxu0 0.0
  %410 = vmatpush1.msra.mxu0 0.0
  %411 = vmatprep.subr.mxu0 0.0
  %412 = vmatpush1.msra.mxu0 0.0
  %413 = vmatprep.subr.mxu0 0.0
  %414 = vmatpush1.msra.mxu0 0.0
  %415 = vmatprep.subr.mxu0 0.0
  %416 = vmatpush1.msra.mxu0 0.0
  %417 = vmatprep.subr.mxu0 0.0
  %418 = vmatpush1.msra.mxu0 0.0
  %419 = vmatprep.subr.mxu0 0.0
  %420 = vmatpush1.msra.mxu0 0.0
  %421 = vmatprep.subr.mxu0 0.0
  %422 = vmatpush1.msra.mxu0 0.0
  %423 = vmatprep.subr.mxu0 0.0
  %424 = vmatpush1.msra.mxu0 0.0
  %425 = vmatprep.subr.mxu0 0.0
  %426 = vmatpush1.msra.mxu0 0.0
  %427 = vmatprep.subr.mxu0 0.0
  %428 = vmatpush1.msra.mxu0 0.0
  %429 = vmatprep.subr.mxu0 0.0
  %430 = vmatpush1.msra.mxu0 0.0
  %431 = vmatprep.subr.mxu0 0.0
  %432 = vmatpush1.msra.mxu0 0.0
  %433 = vmatprep.subr.mxu0 0.0
  %434 = vmatpush1.msra.mxu0 0.0
  %435 = vmatprep.subr.mxu0 0.0
  %436 = vmatpush1.msra.mxu0 0.0
  %437 = vmatprep.subr.mxu0 0.0
  %438 = vmatpush1.msra.mxu0 0.0
  %439 = vmatprep.subr.mxu0 0.0
  %440 = vmatpush1.msra.mxu0 0.0
  %441 = vmatprep.subr.mxu0 0.0
  %442 = vmatpush1.msra.mxu0 0.0
  %443 = vmatprep.mubr.f32.mxu0 0.0
  %444 = vmatmul.mubr.f32.gmra.mrb[0].mxu0 %v377
  %v445 = vpop.f32.mrb[0].mxu0
  %v446 = vadd.f32 0.0, %v445
  %v447 = vpop.f32.mrb[0].mxu0
  %448 = vdwg.mxu0
  %v449 = vadd.f32 %v155, %v446
  %v450 = vtanh.pop %v449
  %v451 = vmul.f32 %v450, 0.5
  %v452 = vadd.f32 %v451, 0.5
  %v453 = vmul.f32 %v452, %v367
  %455 = vrot.lane.b32.xlu0 %v450, 32
  %v456 = vpop.permute.xlu0 %455
  %v458 = vmul.f32 %v452, %v456
  %460 = vrot.lane.b32.xlu0 %v458, 32
  %v461 = vpop.permute.xlu0 %460
  %v463 = vadd.f32 %v453, %v461
  %v464 = vtanh.pop %v463
  %466 = vrot.lane.b32.xlu0 %v464, 32
  %v467 = vpop.permute.xlu0 %466
  %v469 = vmul.f32 %v452, %v467
  %471 = vrot.lane.b32.xlu0 %v469, 64
  %v472 = vpop.permute.xlu0 %471
  %v473 = vsel %vm183, %v472, 0
  %475 = vmatprep.subr.mxu0 0.0
  %476 = vmatpush1.msra.mxu0 %v42
  %477 = vmatprep.subr.mxu0 0.0
  %478 = vmatpush1.msra.mxu0 %v43
  %479 = vmatprep.subr.mxu0 0.0
  %480 = vmatpush1.msra.mxu0 %v44
  %481 = vmatprep.subr.mxu0 0.0
  %482 = vmatpush1.msra.mxu0 %v45
  %483 = vmatprep.subr.mxu0 0.0
  %484 = vmatpush1.msra.mxu0 0.0
  %485 = vmatprep.subr.mxu0 0.0
  %486 = vmatpush1.msra.mxu0 0.0
  %487 = vmatprep.subr.mxu0 0.0
  %488 = vmatpush1.msra.mxu0 0.0
  %489 = vmatprep.subr.mxu0 0.0
  %490 = vmatpush1.msra.mxu0 0.0
  %491 = vmatprep.subr.mxu0 0.0
  %492 = vmatpush1.msra.mxu0 0.0
  %493 = vmatprep.subr.mxu0 0.0
  %494 = vmatpush1.msra.mxu0 0.0
  %495 = vmatprep.subr.mxu0 0.0
  %496 = vmatpush1.msra.mxu0 0.0
  %497 = vmatprep.subr.mxu0 0.0
  %498 = vmatpush1.msra.mxu0 0.0
  %499 = vmatprep.subr.mxu0 0.0
  %500 = vmatpush1.msra.mxu0 0.0
  %501 = vmatprep.subr.mxu0 0.0
  %502 = vmatpush1.msra.mxu0 0.0
  %503 = vmatprep.subr.mxu0 0.0
  %504 = vmatpush1.msra.mxu0 0.0
  %505 = vmatprep.subr.mxu0 0.0
  %506 = vmatpush1.msra.mxu0 0.0
  %507 = vmatprep.subr.mxu0 0.0
  %508 = vmatpush1.msra.mxu0 0.0
  %509 = vmatprep.subr.mxu0 0.0
  %510 = vmatpush1.msra.mxu0 0.0
  %511 = vmatprep.subr.mxu0 0.0
  %512 = vmatpush1.msra.mxu0 0.0
  %513 = vmatprep.subr.mxu0 0.0
  %514 = vmatpush1.msra.mxu0 0.0
  %515 = vmatprep.subr.mxu0 0.0
  %516 = vmatpush1.msra.mxu0 0.0
  %517 = vmatprep.subr.mxu0 0.0
  %518 = vmatpush1.msra.mxu0 0.0
  %519 = vmatprep.subr.mxu0 0.0
  %520 = vmatpush1.msra.mxu0 0.0
  %521 = vmatprep.subr.mxu0 0.0
  %522 = vmatpush1.msra.mxu0 0.0
  %523 = vmatprep.subr.mxu0 0.0
  %524 = vmatpush1.msra.mxu0 0.0
  %525 = vmatprep.subr.mxu0 0.0
  %526 = vmatpush1.msra.mxu0 0.0
  %527 = vmatprep.subr.mxu0 0.0
  %528 = vmatpush1.msra.mxu0 0.0
  %529 = vmatprep.subr.mxu0 0.0
  %530 = vmatpush1.msra.mxu0 0.0
  %531 = vmatprep.subr.mxu0 0.0
  %532 = vmatpush1.msra.mxu0 0.0
  %533 = vmatprep.subr.mxu0 0.0
  %534 = vmatpush1.msra.mxu0 0.0
  %535 = vmatprep.subr.mxu0 0.0
  %536 = vmatpush1.msra.mxu0 0.0
  %537 = vmatprep.subr.mxu0 0.0
  %538 = vmatpush1.msra.mxu0 0.0
  %539 = vmatprep.mubr.f32.mxu0 0.0
  %540 = vmatmul.mubr.f32.gmra.mrb[0].mxu0 %v473
  %v541 = vpop.f32.mrb[0].mxu0
  %v542 = vadd.f32 0.0, %v541
  %v543 = vpop.f32.mrb[0].mxu0
  %544 = vdwg.mxu0
  %v545 = vadd.f32 %v160, %v542
  %v546 = vtanh.pop %v545
  %v547 = vmul.f32 %v546, 0.5
  %v548 = vadd.f32 %v547, 0.5
  %v549 = vmul.f32 %v548, %v463
  %551 = vrot.lane.b32.xlu0 %v546, 32
  %v552 = vpop.permute.xlu0 %551
  %v554 = vmul.f32 %v548, %v552
  %556 = vrot.lane.b32.xlu0 %v554, 32
  %v557 = vpop.permute.xlu0 %556
  %v559 = vadd.f32 %v549, %v557
  %v560 = vtanh.pop %v559
  %562 = vrot.lane.b32.xlu0 %v560, 32
  %v563 = vpop.permute.xlu0 %562
  %v565 = vmul.f32 %v548, %v563
  %567 = vrot.lane.b32.xlu0 %v565, 64
  %v568 = vpop.permute.xlu0 %567
  %v569 = vsel %vm183, %v568, 0
  %571 = vmatprep.subr.mxu0 0.0
  %572 = vmatpush1.msra.mxu0 %v42
  %573 = vmatprep.subr.mxu0 0.0
  %574 = vmatpush1.msra.mxu0 %v43
  %575 = vmatprep.subr.mxu0 0.0
  %576 = vmatpush1.msra.mxu0 %v44
  %577 = vmatprep.subr.mxu0 0.0
  %578 = vmatpush1.msra.mxu0 %v45
  %579 = vmatprep.subr.mxu0 0.0
  %580 = vmatpush1.msra.mxu0 0.0
  %581 = vmatprep.subr.mxu0 0.0
  %582 = vmatpush1.msra.mxu0 0.0
  %583 = vmatprep.subr.mxu0 0.0
  %584 = vmatpush1.msra.mxu0 0.0
  %585 = vmatprep.subr.mxu0 0.0
  %586 = vmatpush1.msra.mxu0 0.0
  %587 = vmatprep.subr.mxu0 0.0
  %588 = vmatpush1.msra.mxu0 0.0
  %589 = vmatprep.subr.mxu0 0.0
  %590 = vmatpush1.msra.mxu0 0.0
  %591 = vmatprep.subr.mxu0 0.0
  %592 = vmatpush1.msra.mxu0 0.0
  %593 = vmatprep.subr.mxu0 0.0
  %594 = vmatpush1.msra.mxu0 0.0
  %595 = vmatprep.subr.mxu0 0.0
  %596 = vmatpush1.msra.mxu0 0.0
  %597 = vmatprep.subr.mxu0 0.0
  %598 = vmatpush1.msra.mxu0 0.0
  %599 = vmatprep.subr.mxu0 0.0
  %600 = vmatpush1.msra.mxu0 0.0
  %601 = vmatprep.subr.mxu0 0.0
  %602 = vmatpush1.msra.mxu0 0.0
  %603 = vmatprep.subr.mxu0 0.0
  %604 = vmatpush1.msra.mxu0 0.0
  %605 = vmatprep.subr.mxu0 0.0
  %606 = vmatpush1.msra.mxu0 0.0
  %607 = vmatprep.subr.mxu0 0.0
  %608 = vmatpush1.msra.mxu0 0.0
  %609 = vmatprep.subr.mxu0 0.0
  %610 = vmatpush1.msra.mxu0 0.0
  %611 = vmatprep.subr.mxu0 0.0
  %612 = vmatpush1.msra.mxu0 0.0
  %613 = vmatprep.subr.mxu0 0.0
  %614 = vmatpush1.msra.mxu0 0.0
  %615 = vmatprep.subr.mxu0 0.0
  %616 = vmatpush1.msra.mxu0 0.0
  %617 = vmatprep.subr.mxu0 0.0
  %618 = vmatpush1.msra.mxu0 0.0
  %619 = vmatprep.subr.mxu0 0.0
  %620 = vmatpush1.msra.mxu0 0.0
  %621 = vmatprep.subr.mxu0 0.0
  %622 = vmatpush1.msra.mxu0 0.0
  %623 = vmatprep.subr.mxu0 0.0
  %624 = vmatpush1.msra.mxu0 0.0
  %625 = vmatprep.subr.mxu0 0.0
  %626 = vmatpush1.msra.mxu0 0.0
  %627 = vmatprep.subr.mxu0 0.0
  %628 = vmatpush1.msra.mxu0 0.0
  %629 = vmatprep.subr.mxu0 0.0
  %630 = vmatpush1.msra.mxu0 0.0
  %631 = vmatprep.subr.mxu0 0.0
  %632 = vmatpush1.msra.mxu0 0.0
  %633 = vmatprep.subr.mxu0 0.0
  %634 = vmatpush1.msra.mxu0 0.0
  %635 = vmatprep.mubr.f32.mxu0 0.0
  %636 = vmatmul.mubr.f32.gmra.mrb[0].mxu0 %v569
  %v637 = vpop.f32.mrb[0].mxu0
  %v638 = vadd.f32 0.0, %v637
  %v639 = vpop.f32.mrb[0].mxu0
  %640 = vdwg.mxu0
  %v641 = vadd.f32 %v165, %v638
  %v642 = vtanh.pop %v641
  %v643 = vmul.f32 %v642, 0.5
  %v644 = vadd.f32 %v643, 0.5
  %v645 = vmul.f32 %v644, %v559
  %647 = vrot.lane.b32.xlu0 %v642, 32
  %v648 = vpop.permute.xlu0 %647
  %v650 = vmul.f32 %v644, %v648
  %652 = vrot.lane.b32.xlu0 %v650, 32
  %v653 = vpop.permute.xlu0 %652
  %v655 = vadd.f32 %v645, %v653
  %v656 = vtanh.pop %v655
  %658 = vrot.lane.b32.xlu0 %v656, 32
  %v659 = vpop.permute.xlu0 %658
  %v661 = vmul.f32 %v644, %v659
  %663 = vrot.lane.b32.xlu0 %v661, 64
  %v664 = vpop.permute.xlu0 %663
  %v665 = vsel %vm183, %v664, 0
  %667 = vmatprep.subr.mxu0 0.0
  %668 = vmatpush1.msra.mxu0 %v42
  %669 = vmatprep.subr.mxu0 0.0
  %670 = vmatpush1.msra.mxu0 %v43
  %671 = vmatprep.subr.mxu0 0.0
  %672 = vmatpush1.msra.mxu0 %v44
  %673 = vmatprep.subr.mxu0 0.0
  %674 = vmatpush1.msra.mxu0 %v45
  %675 = vmatprep.subr.mxu0 0.0
  %676 = vmatpush1.msra.mxu0 0.0
  %677 = vmatprep.subr.mxu0 0.0
  %678 = vmatpush1.msra.mxu0 0.0
  %679 = vmatprep.subr.mxu0 0.0
  %680 = vmatpush1.msra.mxu0 0.0
  %681 = vmatprep.subr.mxu0 0.0
  %682 = vmatpush1.msra.mxu0 0.0
  %683 = vmatprep.subr.mxu0 0.0
  %684 = vmatpush1.msra.mxu0 0.0
  %685 = vmatprep.subr.mxu0 0.0
  %686 = vmatpush1.msra.mxu0 0.0
  %687 = vmatprep.subr.mxu0 0.0
  %688 = vmatpush1.msra.mxu0 0.0
  %689 = vmatprep.subr.mxu0 0.0
  %690 = vmatpush1.msra.mxu0 0.0
  %691 = vmatprep.subr.mxu0 0.0
  %692 = vmatpush1.msra.mxu0 0.0
  %693 = vmatprep.subr.mxu0 0.0
  %694 = vmatpush1.msra.mxu0 0.0
  %695 = vmatprep.subr.mxu0 0.0
  %696 = vmatpush1.msra.mxu0 0.0
  %697 = vmatprep.subr.mxu0 0.0
  %698 = vmatpush1.msra.mxu0 0.0
  %699 = vmatprep.subr.mxu0 0.0
  %700 = vmatpush1.msra.mxu0 0.0
  %701 = vmatprep.subr.mxu0 0.0
  %702 = vmatpush1.msra.mxu0 0.0
  %703 = vmatprep.subr.mxu0 0.0
  %704 = vmatpush1.msra.mxu0 0.0
  %705 = vmatprep.subr.mxu0 0.0
  %706 = vmatpush1.msra.mxu0 0.0
  %707 = vmatprep.subr.mxu0 0.0
  %708 = vmatpush1.msra.mxu0 0.0
  %709 = vmatprep.subr.mxu0 0.0
  %710 = vmatpush1.msra.mxu0 0.0
  %711 = vmatprep.subr.mxu0 0.0
  %712 = vmatpush1.msra.mxu0 0.0
  %713 = vmatprep.subr.mxu0 0.0
  %714 = vmatpush1.msra.mxu0 0.0
  %715 = vmatprep.subr.mxu0 0.0
  %716 = vmatpush1.msra.mxu0 0.0
  %717 = vmatprep.subr.mxu0 0.0
  %718 = vmatpush1.msra.mxu0 0.0
  %719 = vmatprep.subr.mxu0 0.0
  %720 = vmatpush1.msra.mxu0 0.0
  %721 = vmatprep.subr.mxu0 0.0
  %722 = vmatpush1.msra.mxu0 0.0
  %723 = vmatprep.subr.mxu0 0.0
  %724 = vmatpush1.msra.mxu0 0.0
  %725 = vmatprep.subr.mxu0 0.0
  %726 = vmatpush1.msra.mxu0 0.0
  %727 = vmatprep.subr.mxu0 0.0
  %728 = vmatpush1.msra.mxu0 0.0
  %729 = vmatprep.subr.mxu0 0.0
  %730 = vmatpush1.msra.mxu0 0.0
  %731 = vmatprep.mubr.f32.mxu0 0.0
  %732 = vmatmul.mubr.f32.gmra.mrb[0].mxu0 %v665
  %v733 = vpop.f32.mrb[0].mxu0
  %v734 = vadd.f32 0.0, %v733
  %v735 = vpop.f32.mrb[0].mxu0
  %736 = vdwg.mxu0
  %v737 = vadd.f32 %v170, %v734
  %v738 = vtanh.pop %v737
  %v739 = vmul.f32 %v738, 0.5
  %v740 = vadd.f32 %v739, 0.5
  %v741 = vmul.f32 %v740, %v655
  %743 = vrot.lane.b32.xlu0 %v738, 32
  %v744 = vpop.permute.xlu0 %743
  %v746 = vmul.f32 %v740, %v744
  %748 = vrot.lane.b32.xlu0 %v746, 32
  %v749 = vpop.permute.xlu0 %748
  %v751 = vadd.f32 %v741, %v749
  %v752 = vtanh.pop %v751
  %754 = vrot.lane.b32.xlu0 %v752, 32
  %v755 = vpop.permute.xlu0 %754
  %v757 = vmul.f32 %v740, %v755
  %759 = vrot.lane.b32.xlu0 %v757, 64
  %v760 = vpop.permute.xlu0 %759
  %v761 = vsel %vm183, %v760, 0
  %763 = vmatprep.subr.mxu0 0.0
  %764 = vmatpush1.msra.mxu0 %v42
  %765 = vmatprep.subr.mxu0 0.0
  %766 = vmatpush1.msra.mxu0 %v43
  %767 = vmatprep.subr.mxu0 0.0
  %768 = vmatpush1.msra.mxu0 %v44
  %769 = vmatprep.subr.mxu0 0.0
  %770 = vmatpush1.msra.mxu0 %v45
  %771 = vmatprep.subr.mxu0 0.0
  %772 = vmatpush1.msra.mxu0 0.0
  %773 = vmatprep.subr.mxu0 0.0
  %774 = vmatpush1.msra.mxu0 0.0
  %775 = vmatprep.subr.mxu0 0.0
  %776 = vmatpush1.msra.mxu0 0.0
  %777 = vmatprep.subr.mxu0 0.0
  %778 = vmatpush1.msra.mxu0 0.0
  %779 = vmatprep.subr.mxu0 0.0
  %780 = vmatpush1.msra.mxu0 0.0
  %781 = vmatprep.subr.mxu0 0.0
  %782 = vmatpush1.msra.mxu0 0.0
  %783 = vmatprep.subr.mxu0 0.0
  %784 = vmatpush1.msra.mxu0 0.0
  %785 = vmatprep.subr.mxu0 0.0
  %786 = vmatpush1.msra.mxu0 0.0
  %787 = vmatprep.subr.mxu0 0.0
  %788 = vmatpush1.msra.mxu0 0.0
  %789 = vmatprep.subr.mxu0 0.0
  %790 = vmatpush1.msra.mxu0 0.0
  %791 = vmatprep.subr.mxu0 0.0
  %792 = vmatpush1.msra.mxu0 0.0
  %793 = vmatprep.subr.mxu0 0.0
  %794 = vmatpush1.msra.mxu0 0.0
  %795 = vmatprep.subr.mxu0 0.0
  %796 = vmatpush1.msra.mxu0 0.0
  %797 = vmatprep.subr.mxu0 0.0
  %798 = vmatpush1.msra.mxu0 0.0
  %799 = vmatprep.subr.mxu0 0.0
  %800 = vmatpush1.msra.mxu0 0.0
  %801 = vmatprep.subr.mxu0 0.0
  %802 = vmatpush1.msra.mxu0 0.0
  %803 = vmatprep.subr.mxu0 0.0
  %804 = vmatpush1.msra.mxu0 0.0
  %805 = vmatprep.subr.mxu0 0.0
  %806 = vmatpush1.msra.mxu0 0.0
  %807 = vmatprep.subr.mxu0 0.0
  %808 = vmatpush1.msra.mxu0 0.0
  %809 = vmatprep.subr.mxu0 0.0
  %810 = vmatpush1.msra.mxu0 0.0
  %811 = vmatprep.subr.mxu0 0.0
  %812 = vmatpush1.msra.mxu0 0.0
  %813 = vmatprep.subr.mxu0 0.0
  %814 = vmatpush1.msra.mxu0 0.0
  %815 = vmatprep.subr.mxu0 0.0
  %816 = vmatpush1.msra.mxu0 0.0
  %817 = vmatprep.subr.mxu0 0.0
  %818 = vmatpush1.msra.mxu0 0.0
  %819 = vmatprep.subr.mxu0 0.0
  %820 = vmatpush1.msra.mxu0 0.0
  %821 = vmatprep.subr.mxu0 0.0
  %822 = vmatpush1.msra.mxu0 0.0
  %823 = vmatprep.subr.mxu0 0.0
  %824 = vmatpush1.msra.mxu0 0.0
  %825 = vmatprep.subr.mxu0 0.0
  %826 = vmatpush1.msra.mxu0 0.0
  %827 = vmatprep.mubr.f32.mxu0 0.0
  %828 = vmatmul.mubr.f32.gmra.mrb[0].mxu0 %v761
  %v829 = vpop.f32.mrb[0].mxu0
  %v830 = vadd.f32 0.0, %v829
  %v831 = vpop.f32.mrb[0].mxu0
  %832 = vdwg.mxu0
  %v833 = vadd.f32 %v175, %v830
  %v834 = vtanh.pop %v833
  %v835 = vmul.f32 %v834, 0.5
  %v836 = vadd.f32 %v835, 0.5
  %v837 = vmul.f32 %v836, %v751
  %839 = vrot.lane.b32.xlu0 %v834, 32
  %v840 = vpop.permute.xlu0 %839
  %v842 = vmul.f32 %v836, %v840
  %844 = vrot.lane.b32.xlu0 %v842, 32
  %v845 = vpop.permute.xlu0 %844
  %v847 = vadd.f32 %v837, %v845
  %v848 = vtanh.pop %v847
  %850 = vrot.lane.b32.xlu0 %v848, 32
  %v851 = vpop.permute.xlu0 %850
  %v853 = vmul.f32 %v836, %v851
  %855 = vrot.lane.b32.xlu0 %v853, 64
  %v856 = vpop.permute.xlu0 %855
  %v857 = vsel %vm183, %v856, 0
  %859 = vmatprep.subr.mxu0 0.0
  %860 = vmatpush1.msra.mxu0 %v42
  %861 = vmatprep.subr.mxu0 0.0
  %862 = vmatpush1.msra.mxu0 %v43
  %863 = vmatprep.subr.mxu0 0.0
  %864 = vmatpush1.msra.mxu0 %v44
  %865 = vmatprep.subr.mxu0 0.0
  %866 = vmatpush1.msra.mxu0 %v45
  %867 = vmatprep.subr.mxu0 0.0
  %868 = vmatpush1.msra.mxu0 0.0
  %869 = vmatprep.subr.mxu0 0.0
  %870 = vmatpush1.msra.mxu0 0.0
  %871 = vmatprep.subr.mxu0 0.0
  %872 = vmatpush1.msra.mxu0 0.0
  %873 = vmatprep.subr.mxu0 0.0
  %874 = vmatpush1.msra.mxu0 0.0
  %875 = vmatprep.subr.mxu0 0.0
  %876 = vmatpush1.msra.mxu0 0.0
  %877 = vmatprep.subr.mxu0 0.0
  %878 = vmatpush1.msra.mxu0 0.0
  %879 = vmatprep.subr.mxu0 0.0
  %880 = vmatpush1.msra.mxu0 0.0
  %881 = vmatprep.subr.mxu0 0.0
  %882 = vmatpush1.msra.mxu0 0.0
  %883 = vmatprep.subr.mxu0 0.0
  %884 = vmatpush1.msra.mxu0 0.0
  %885 = vmatprep.subr.mxu0 0.0
  %886 = vmatpush1.msra.mxu0 0.0
  %887 = vmatprep.subr.mxu0 0.0
  %888 = vmatpush1.msra.mxu0 0.0
  %889 = vmatprep.subr.mxu0 0.0
  %890 = vmatpush1.msra.mxu0 0.0
  %891 = vmatprep.subr.mxu0 0.0
  %892 = vmatpush1.msra.mxu0 0.0
  %893 = vmatprep.subr.mxu0 0.0
  %894 = vmatpush1.msra.mxu0 0.0
  %895 = vmatprep.subr.mxu0 0.0
  %896 = vmatpush1.msra.mxu0 0.0
  %897 = vmatprep.subr.mxu0 0.0
  %898 = vmatpush1.msra.mxu0 0.0
  %899 = vmatprep.subr.mxu0 0.0
  %900 = vmatpush1.msra.mxu0 0.0
  %901 = vmatprep.subr.mxu0 0.0
  %902 = vmatpush1.msra.mxu0 0.0
  %903 = vmatprep.subr.mxu0 0.0
  %904 = vmatpush1.msra.mxu0 0.0
  %905 = vmatprep.subr.mxu0 0.0
  %906 = vmatpush1.msra.mxu0 0.0
  %907 = vmatprep.subr.mxu0 0.0
  %908 = vmatpush1.msra.mxu0 0.0
  %909 = vmatprep.subr.mxu0 0.0
  %910 = vmatpush1.msra.mxu0 0.0
  %911 = vmatprep.subr.mxu0 0.0
  %912 = vmatpush1.msra.mxu0 0.0
  %913 = vmatprep.subr.mxu0 0.0
  %914 = vmatpush1.msra.mxu0 0.0
  %915 = vmatprep.subr.mxu0 0.0
  %916 = vmatpush1.msra.mxu0 0.0
  %917 = vmatprep.subr.mxu0 0.0
  %918 = vmatpush1.msra.mxu0 0.0
  %919 = vmatprep.subr.mxu0 0.0
  %920 = vmatpush1.msra.mxu0 0.0
  %921 = vmatprep.subr.mxu0 0.0
  %922 = vmatpush1.msra.mxu0 0.0
  %923 = vmatprep.mubr.f32.mxu0 0.0
  %924 = vmatmul.mubr.f32.gmra.mrb[0].mxu0 %v857
  %v925 = vpop.f32.mrb[0].mxu0
  %v926 = vadd.f32 0.0, %v925
  %v927 = vpop.f32.mrb[0].mxu0
  %928 = vdwg.mxu0
  %v929 = vadd.f32 %v180, %v926
  %v930 = vtanh.pop %v929
  %v931 = vmul.f32 %v930, 0.5
  %v932 = vadd.f32 %v931, 0.5
  %v933 = vmul.f32 %v932, %v847
  %935 = vrot.lane.b32.xlu0 %v930, 32
  %v936 = vpop.permute.xlu0 %935
  %v938 = vmul.f32 %v932, %v936
  %940 = vrot.lane.b32.xlu0 %v938, 32
  %v941 = vpop.permute.xlu0 %940
  %v943 = vadd.f32 %v933, %v941
  %v944 = vtanh.pop %v943
  %946 = vrot.lane.b32.xlu0 %v944, 32
  %v947 = vpop.permute.xlu0 %946
  %v949 = vmul.f32 %v932, %v947
  %v950 = vld [vmem:[%s4] sm:$0xff]
  %v951 = vld [vmem:[%s4 + $0x8] sm:$0xff]
  %v952 = vld [vmem:[%s4 + $0x10] sm:$0xff]
  %v953 = vld [vmem:[%s4 + $0x18] sm:$0xff]
  %v954 = vld [vmem:[%s5] sm:$0xff]
  %v955 = vld [vmem:[%s5 + $0x8] sm:$0xff]
  %v956 = vld [vmem:[%s5 + $0x10] sm:$0xff]
  %v957 = vld [vmem:[%s5 + $0x18] sm:$0xff]
  %v958 = vld [vmem:[%s6] sm:$0x1]
  %v960 = vlaneseq
  %v961 = vshrl.u32 %v960, 7
  %v962 = vsub.s32 0, %v961
  %v963 = vrot.slane %v958, %v962
  %966 = vrot.lane.b32.xlu0 %v949, 64
  %v967 = vpop.permute.xlu0 %966
  %v968 = vsel %vm183, %v967, 0
  %970 = vmatprep.subr.mxu0 0.0
  %971 = vmatpush1.msra.mxu0 %v950
  %972 = vmatprep.subr.mxu0 0.0
  %973 = vmatpush1.msra.mxu0 %v951
  %974 = vmatprep.subr.mxu0 0.0
  %975 = vmatpush1.msra.mxu0 %v952
  %976 = vmatprep.subr.mxu0 0.0
  %977 = vmatpush1.msra.mxu0 %v953
  %978 = vmatprep.subr.mxu0 0.0
  %979 = vmatpush1.msra.mxu0 0.0
  %980 = vmatprep.subr.mxu0 0.0
  %981 = vmatpush1.msra.mxu0 0.0
  %982 = vmatprep.subr.mxu0 0.0
  %983 = vmatpush1.msra.mxu0 0.0
  %984 = vmatprep.subr.mxu0 0.0
  %985 = vmatpush1.msra.mxu0 0.0
  %986 = vmatprep.subr.mxu0 0.0
  %987 = vmatpush1.msra.mxu0 0.0
  %988 = vmatprep.subr.mxu0 0.0
  %989 = vmatpush1.msra.mxu0 0.0
  %990 = vmatprep.subr.mxu0 0.0
  %991 = vmatpush1.msra.mxu0 0.0
  %992 = vmatprep.subr.mxu0 0.0
  %993 = vmatpush1.msra.mxu0 0.0
  %994 = vmatprep.subr.mxu0 0.0
  %995 = vmatpush1.msra.mxu0 0.0
  %996 = vmatprep.subr.mxu0 0.0
  %997 = vmatpush1.msra.mxu0 0.0
  %998 = vmatprep.subr.mxu0 0.0
  %999 = vmatpush1.msra.mxu0 0.0
  %1000 = vmatprep.subr.mxu0 0.0
  %1001 = vmatpush1.msra.mxu0 0.0
  %1002 = vmatprep.subr.mxu0 0.0
  %1003 = vmatpush1.msra.mxu0 0.0
  %1004 = vmatprep.subr.mxu0 0.0
  %1005 = vmatpush1.msra.mxu0 0.0
  %1006 = vmatprep.subr.mxu0 0.0
  %1007 = vmatpush1.msra.mxu0 0.0
  %1008 = vmatprep.subr.mxu0 0.0
  %1009 = vmatpush1.msra.mxu0 0.0
  %1010 = vmatprep.subr.mxu0 0.0
  %1011 = vmatpush1.msra.mxu0 0.0
  %1012 = vmatprep.subr.mxu0 0.0
  %1013 = vmatpush1.msra.mxu0 0.0
  %1014 = vmatprep.subr.mxu0 0.0
  %1015 = vmatpush1.msra.mxu0 0.0
  %1016 = vmatprep.subr.mxu0 0.0
  %1017 = vmatpush1.msra.mxu0 0.0
  %1018 = vmatprep.subr.mxu0 0.0
  %1019 = vmatpush1.msra.mxu0 0.0
  %1020 = vmatprep.subr.mxu0 0.0
  %1021 = vmatpush1.msra.mxu0 0.0
  %1022 = vmatprep.subr.mxu0 0.0
  %1023 = vmatpush1.msra.mxu0 0.0
  %1024 = vmatprep.subr.mxu0 0.0
  %1025 = vmatpush1.msra.mxu0 0.0
  %1026 = vmatprep.subr.mxu0 0.0
  %1027 = vmatpush1.msra.mxu0 0.0
  %1028 = vmatprep.subr.mxu0 0.0
  %1029 = vmatpush1.msra.mxu0 0.0
  %1030 = vmatprep.subr.mxu0 0.0
  %1031 = vmatpush1.msra.mxu0 0.0
  %1032 = vmatprep.subr.mxu0 0.0
  %1033 = vmatpush1.msra.mxu0 0.0
  %1034 = vmatprep.mubr.f32.mxu0 0.0
  %1035 = vmatmul.mubr.f32.gmra.mrb[0].mxu0 %v281
  %v1036 = vpop.f32.mrb[0].mxu0
  %v1037 = vadd.f32 %v963, %v1036
  %v1038 = vpop.f32.mrb[0].mxu0
  %1039 = vmatprep.mubr.f32.mxu0 0.0
  %1040 = vmatmul.mubr.f32.gmra.mrb[0].mxu0 %v377
  %v1041 = vpop.f32.mrb[0].mxu0
  %v1042 = vadd.f32 %v963, %v1041
  %v1043 = vpop.f32.mrb[0].mxu0
  %1044 = vmatprep.mubr.f32.mxu0 0.0
  %1045 = vmatmul.mubr.f32.gmra.mrb[0].mxu0 %v473
  %v1046 = vpop.f32.mrb[0].mxu0
  %v1047 = vadd.f32 %v963, %v1046
  %v1048 = vpop.f32.mrb[0].mxu0
  %1049 = vmatprep.mubr.f32.mxu0 0.0
  %1050 = vmatmul.mubr.f32.gmra.mrb[0].mxu0 %v569
  %v1051 = vpop.f32.mrb[0].mxu0
  %v1052 = vadd.f32 %v963, %v1051
  %v1053 = vpop.f32.mrb[0].mxu0
  %1054 = vmatprep.mubr.f32.mxu0 0.0
  %1055 = vmatmul.mubr.f32.gmra.mrb[0].mxu0 %v665
  %v1056 = vpop.f32.mrb[0].mxu0
  %v1057 = vadd.f32 %v963, %v1056
  %v1058 = vpop.f32.mrb[0].mxu0
  %1059 = vmatprep.mubr.f32.mxu0 0.0
  %1060 = vmatmul.mubr.f32.gmra.mrb[0].mxu0 %v761
  %v1061 = vpop.f32.mrb[0].mxu0
  %v1062 = vadd.f32 %v963, %v1061
  %v1063 = vpop.f32.mrb[0].mxu0
  %1064 = vmatprep.mubr.f32.mxu0 0.0
  %1065 = vmatmul.mubr.f32.gmra.mrb[0].mxu0 %v857
  %v1066 = vpop.f32.mrb[0].mxu0
  %v1067 = vadd.f32 %v963, %v1066
  %v1068 = vpop.f32.mrb[0].mxu0
  %1069 = vmatprep.mubr.f32.mxu0 0.0
  %1070 = vmatmul.mubr.f32.gmra.mrb[0].mxu0 %v968
  %v1071 = vpop.f32.mrb[0].mxu0
  %v1072 = vadd.f32 %v963, %v1071
  %v1073 = vpop.f32.mrb[0].mxu0
  %1074 = vdwg.mxu0
  %1075 = vmatprep.subr.mxu0 0.0
  %1076 = vmatpush1.msra.mxu0 %v954
  %1077 = vmatprep.subr.mxu0 0.0
  %1078 = vmatpush1.msra.mxu0 %v955
  %1079 = vmatprep.subr.mxu0 0.0
  %1080 = vmatpush1.msra.mxu0 %v956
  %1081 = vmatprep.subr.mxu0 0.0
  %1082 = vmatpush1.msra.mxu0 %v957
  %1083 = vmatprep.subr.mxu0 0.0
  %1084 = vmatpush1.msra.mxu0 0.0
  %1085 = vmatprep.subr.mxu0 0.0
  %1086 = vmatpush1.msra.mxu0 0.0
  %1087 = vmatprep.subr.mxu0 0.0
  %1088 = vmatpush1.msra.mxu0 0.0
  %1089 = vmatprep.subr.mxu0 0.0
  %1090 = vmatpush1.msra.mxu0 0.0
  %1091 = vmatprep.subr.mxu0 0.0
  %1092 = vmatpush1.msra.mxu0 0.0
  %1093 = vmatprep.subr.mxu0 0.0
  %1094 = vmatpush1.msra.mxu0 0.0
  %1095 = vmatprep.subr.mxu0 0.0
  %1096 = vmatpush1.msra.mxu0 0.0
  %1097 = vmatprep.subr.mxu0 0.0
  %1098 = vmatpush1.msra.mxu0 0.0
  %1099 = vmatprep.subr.mxu0 0.0
  %1100 = vmatpush1.msra.mxu0 0.0
  %1101 = vmatprep.subr.mxu0 0.0
  %1102 = vmatpush1.msra.mxu0 0.0
  %1103 = vmatprep.subr.mxu0 0.0
  %1104 = vmatpush1.msra.mxu0 0.0
  %1105 = vmatprep.subr.mxu0 0.0
  %1106 = vmatpush1.msra.mxu0 0.0
  %1107 = vmatprep.subr.mxu0 0.0
  %1108 = vmatpush1.msra.mxu0 0.0
  %1109 = vmatprep.subr.mxu0 0.0
  %1110 = vmatpush1.msra.mxu0 0.0
  %1111 = vmatprep.subr.mxu0 0.0
  %1112 = vmatpush1.msra.mxu0 0.0
  %1113 = vmatprep.subr.mxu0 0.0
  %1114 = vmatpush1.msra.mxu0 0.0
  %1115 = vmatprep.subr.mxu0 0.0
  %1116 = vmatpush1.msra.mxu0 0.0
  %1117 = vmatprep.subr.mxu0 0.0
  %1118 = vmatpush1.msra.mxu0 0.0
  %1119 = vmatprep.subr.mxu0 0.0
  %1120 = vmatpush1.msra.mxu0 0.0
  %1121 = vmatprep.subr.mxu0 0.0
  %1122 = vmatpush1.msra.mxu0 0.0
  %1123 = vmatprep.subr.mxu0 0.0
  %1124 = vmatpush1.msra.mxu0 0.0
  %1125 = vmatprep.subr.mxu0 0.0
  %1126 = vmatpush1.msra.mxu0 0.0
  %1127 = vmatprep.subr.mxu0 0.0
  %1128 = vmatpush1.msra.mxu0 0.0
  %1129 = vmatprep.subr.mxu0 0.0
  %1130 = vmatpush1.msra.mxu0 0.0
  %1131 = vmatprep.subr.mxu0 0.0
  %1132 = vmatpush1.msra.mxu0 0.0
  %1133 = vmatprep.subr.mxu0 0.0
  %1134 = vmatpush1.msra.mxu0 0.0
  %1135 = vmatprep.subr.mxu0 0.0
  %1136 = vmatpush1.msra.mxu0 0.0
  %1137 = vmatprep.subr.mxu0 0.0
  %1138 = vmatpush1.msra.mxu0 0.0
  %1139 = vmatprep.mubr.f32.mxu0 0.0
  %1140 = vmatmul.mubr.f32.gmra.mrb[0].mxu0 %v185
  %v1141 = vpop.f32.mrb[0].mxu0
  %v1142 = vadd.f32 0.0, %v1141
  %v1143 = vpop.f32.mrb[0].mxu0
  %1144 = vdwg.mxu0
  %v1145 = vadd.f32 %v1037, %v1142
  %v1146 = vtanh.pop %v1145
  %v1147 = vmul.f32 %v1146, 0.5
  %v1148 = vadd.f32 %v1147, 0.5
  %v1149 = vmul.f32 %v1148, 0.0
  %1151 = vrot.lane.b32.xlu0 %v1146, 32
  %v1152 = vpop.permute.xlu0 %1151
  %v1154 = vmul.f32 %v1148, %v1152
  %1156 = vrot.lane.b32.xlu0 %v1154, 32
  %v1157 = vpop.permute.xlu0 %1156
  %v1159 = vadd.f32 %v1149, %v1157
  %v1160 = vtanh.pop %v1159
  %1162 = vrot.lane.b32.xlu0 %v1160, 32
  %v1163 = vpop.permute.xlu0 %1162
  %v1165 = vmul.f32 %v1148, %v1163
  %1167 = vrot.lane.b32.xlu0 %v1165, 64
  %v1168 = vpop.permute.xlu0 %1167
  %v1169 = vsel %vm183, %v1168, 0
  %1171 = vmatprep.subr.mxu0 0.0
  %1172 = vmatpush1.msra.mxu0 %v954
  %1173 = vmatprep.subr.mxu0 0.0
  %1174 = vmatpush1.msra.mxu0 %v955
  %1175 = vmatprep.subr.mxu0 0.0
  %1176 = vmatpush1.msra.mxu0 %v956
  %1177 = vmatprep.subr.mxu0 0.0
  %1178 = vmatpush1.msra.mxu0 %v957
  %1179 = vmatprep.subr.mxu0 0.0
  %1180 = vmatpush1.msra.mxu0 0.0
  %1181 = vmatprep.subr.mxu0 0.0
  %1182 = vmatpush1.msra.mxu0 0.0
  %1183 = vmatprep.subr.mxu0 0.0
  %1184 = vmatpush1.msra.mxu0 0.0
  %1185 = vmatprep.subr.mxu0 0.0
  %1186 = vmatpush1.msra.mxu0 0.0
  %1187 = vmatprep.subr.mxu0 0.0
  %1188 = vmatpush1.msra.mxu0 0.0
  %1189 = vmatprep.subr.mxu0 0.0
  %1190 = vmatpush1.msra.mxu0 0.0
  %1191 = vmatprep.subr.mxu0 0.0
  %1192 = vmatpush1.msra.mxu0 0.0
  %1193 = vmatprep.subr.mxu0 0.0
  %1194 = vmatpush1.msra.mxu0 0.0
  %1195 = vmatprep.subr.mxu0 0.0
  %1196 = vmatpush1.msra.mxu0 0.0
  %1197 = vmatprep.subr.mxu0 0.0
  %1198 = vmatpush1.msra.mxu0 0.0
  %1199 = vmatprep.subr.mxu0 0.0
  %1200 = vmatpush1.msra.mxu0 0.0
  %1201 = vmatprep.subr.mxu0 0.0
  %1202 = vmatpush1.msra.mxu0 0.0
  %1203 = vmatprep.subr.mxu0 0.0
  %1204 = vmatpush1.msra.mxu0 0.0
  %1205 = vmatprep.subr.mxu0 0.0
  %1206 = vmatpush1.msra.mxu0 0.0
  %1207 = vmatprep.subr.mxu0 0.0
  %1208 = vmatpush1.msra.mxu0 0.0
  %1209 = vmatprep.subr.mxu0 0.0
  %1210 = vmatpush1.msra.mxu0 0.0
  %1211 = vmatprep.subr.mxu0 0.0
  %1212 = vmatpush1.msra.mxu0 0.0
  %1213 = vmatprep.subr.mxu0 0.0
  %1214 = vmatpush1.msra.mxu0 0.0
  %1215 = vmatprep.subr.mxu0 0.0
  %1216 = vmatpush1.msra.mxu0 0.0
  %1217 = vmatprep.subr.mxu0 0.0
  %1218 = vmatpush1.msra.mxu0 0.0
  %1219 = vmatprep.subr.mxu0 0.0
  %1220 = vmatpush1.msra.mxu0 0.0
  %1221 = vmatprep.subr.mxu0 0.0
  %1222 = vmatpush1.msra.mxu0 0.0
  %1223 = vmatprep.subr.mxu0 0.0
  %1224 = vmatpush1.msra.mxu0 0.0
  %1225 = vmatprep.subr.mxu0 0.0
  %1226 = vmatpush1.msra.mxu0 0.0
  %1227 = vmatprep.subr.mxu0 0.0
  %1228 = vmatpush1.msra.mxu0 0.0
  %1229 = vmatprep.subr.mxu0 0.0
  %1230 = vmatpush1.msra.mxu0 0.0
  %1231 = vmatprep.subr.mxu0 0.0
  %1232 = vmatpush1.msra.mxu0 0.0
  %1233 = vmatprep.subr.mxu0 0.0
  %1234 = vmatpush1.msra.mxu0 0.0
  %1235 = vmatprep.mubr.f32.mxu0 0.0
  %1236 = vmatmul.mubr.f32.gmra.mrb[0].mxu0 %v1169
  %v1237 = vpop.f32.mrb[0].mxu0
  %v1238 = vadd.f32 0.0, %v1237
  %v1239 = vpop.f32.mrb[0].mxu0
  %1240 = vdwg.mxu0
  %v1241 = vadd.f32 %v1042, %v1238
  %v1242 = vtanh.pop %v1241
  %v1243 = vmul.f32 %v1242, 0.5
  %v1244 = vadd.f32 %v1243, 0.5
  %v1245 = vmul.f32 %v1244, %v1159
  %1247 = vrot.lane.b32.xlu0 %v1242, 32
  %v1248 = vpop.permute.xlu0 %1247
  %v1250 = vmul.f32 %v1244, %v1248
  %1252 = vrot.lane.b32.xlu0 %v1250, 32
  %v1253 = vpop.permute.xlu0 %1252
  %v1255 = vadd.f32 %v1245, %v1253
  %v1256 = vtanh.pop %v1255
  %1258 = vrot.lane.b32.xlu0 %v1256, 32
  %v1259 = vpop.permute.xlu0 %1258
  %v1261 = vmul.f32 %v1244, %v1259
  %1263 = vrot.lane.b32.xlu0 %v1261, 64
  %v1264 = vpop.permute.xlu0 %1263
  %v1265 = vsel %vm183, %v1264, 0
  %1267 = vmatprep.subr.mxu0 0.0
  %1268 = vmatpush1.msra.mxu0 %v954
  %1269 = vmatprep.subr.mxu0 0.0
  %1270 = vmatpush1.msra.mxu0 %v955
  %1271 = vmatprep.subr.mxu0 0.0
  %1272 = vmatpush1.msra.mxu0 %v956
  %1273 = vmatprep.subr.mxu0 0.0
  %1274 = vmatpush1.msra.mxu0 %v957
  %1275 = vmatprep.subr.mxu0 0.0
  %1276 = vmatpush1.msra.mxu0 0.0
  %1277 = vmatprep.subr.mxu0 0.0
  %1278 = vmatpush1.msra.mxu0 0.0
  %1279 = vmatprep.subr.mxu0 0.0
  %1280 = vmatpush1.msra.mxu0 0.0
  %1281 = vmatprep.subr.mxu0 0.0
  %1282 = vmatpush1.msra.mxu0 0.0
  %1283 = vmatprep.subr.mxu0 0.0
  %1284 = vmatpush1.msra.mxu0 0.0
  %1285 = vmatprep.subr.mxu0 0.0
  %1286 = vmatpush1.msra.mxu0 0.0
  %1287 = vmatprep.subr.mxu0 0.0
  %1288 = vmatpush1.msra.mxu0 0.0
  %1289 = vmatprep.subr.mxu0 0.0
  %1290 = vmatpush1.msra.mxu0 0.0
  %1291 = vmatprep.subr.mxu0 0.0
  %1292 = vmatpush1.msra.mxu0 0.0
  %1293 = vmatprep.subr.mxu0 0.0
  %1294 = vmatpush1.msra.mxu0 0.0
  %1295 = vmatprep.subr.mxu0 0.0
  %1296 = vmatpush1.msra.mxu0 0.0
  %1297 = vmatprep.subr.mxu0 0.0
  %1298 = vmatpush1.msra.mxu0 0.0
  %1299 = vmatprep.subr.mxu0 0.0
  %1300 = vmatpush1.msra.mxu0 0.0
  %1301 = vmatprep.subr.mxu0 0.0
  %1302 = vmatpush1.msra.mxu0 0.0
  %1303 = vmatprep.subr.mxu0 0.0
  %1304 = vmatpush1.msra.mxu0 0.0
  %1305 = vmatprep.subr.mxu0 0.0
  %1306 = vmatpush1.msra.mxu0 0.0
  %1307 = vmatprep.subr.mxu0 0.0
  %1308 = vmatpush1.msra.mxu0 0.0
  %1309 = vmatprep.subr.mxu0 0.0
  %1310 = vmatpush1.msra.mxu0 0.0
  %1311 = vmatprep.subr.mxu0 0.0
  %1312 = vmatpush1.msra.mxu0 0.0
  %1313 = vmatprep.subr.mxu0 0.0
  %1314 = vmatpush1.msra.mxu0 0.0
  %1315 = vmatprep.subr.mxu0 0.0
  %1316 = vmatpush1.msra.mxu0 0.0
  %1317 = vmatprep.subr.mxu0 0.0
  %1318 = vmatpush1.msra.mxu0 0.0
  %1319 = vmatprep.subr.mxu0 0.0
  %1320 = vmatpush1.msra.mxu0 0.0
  %1321 = vmatprep.subr.mxu0 0.0
  %1322 = vmatpush1.msra.mxu0 0.0
  %1323 = vmatprep.subr.mxu0 0.0
  %1324 = vmatpush1.msra.mxu0 0.0
  %1325 = vmatprep.subr.mxu0 0.0
  %1326 = vmatpush1.msra.mxu0 0.0
  %1327 = vmatprep.subr.mxu0 0.0
  %1328 = vmatpush1.msra.mxu0 0.0
  %1329 = vmatprep.subr.mxu0 0.0
  %1330 = vmatpush1.msra.mxu0 0.0
  %1331 = vmatprep.mubr.f32.mxu0 0.0
  %1332 = vmatmul.mubr.f32.gmra.mrb[0].mxu0 %v1265
  %v1333 = vpop.f32.mrb[0].mxu0
  %v1334 = vadd.f32 0.0, %v1333
  %v1335 = vpop.f32.mrb[0].mxu0
  %1336 = vdwg.mxu0
  %v1337 = vadd.f32 %v1047, %v1334
  %v1338 = vtanh.pop %v1337
  %v1339 = vmul.f32 %v1338, 0.5
  %v1340 = vadd.f32 %v1339, 0.5
  %v1341 = vmul.f32 %v1340, %v1255
  %1343 = vrot.lane.b32.xlu0 %v1338, 32
  %v1344 = vpop.permute.xlu0 %1343
  %v1346 = vmul.f32 %v1340, %v1344
  %1348 = vrot.lane.b32.xlu0 %v1346, 32
  %v1349 = vpop.permute.xlu0 %1348
  %v1351 = vadd.f32 %v1341, %v1349
  %v1352 = vtanh.pop %v1351
  %1354 = vrot.lane.b32.xlu0 %v1352, 32
  %v1355 = vpop.permute.xlu0 %1354
  %v1357 = vmul.f32 %v1340, %v1355
  %1359 = vrot.lane.b32.xlu0 %v1357, 64
  %v1360 = vpop.permute.xlu0 %1359
  %v1361 = vsel %vm183, %v1360, 0
  %1363 = vmatprep.subr.mxu0 0.0
  %1364 = vmatpush1.msra.mxu0 %v954
  %1365 = vmatprep.subr.mxu0 0.0
  %1366 = vmatpush1.msra.mxu0 %v955
  %1367 = vmatprep.subr.mxu0 0.0
  %1368 = vmatpush1.msra.mxu0 %v956
  %1369 = vmatprep.subr.mxu0 0.0
  %1370 = vmatpush1.msra.mxu0 %v957
  %1371 = vmatprep.subr.mxu0 0.0
  %1372 = vmatpush1.msra.mxu0 0.0
  %1373 = vmatprep.subr.mxu0 0.0
  %1374 = vmatpush1.msra.mxu0 0.0
  %1375 = vmatprep.subr.mxu0 0.0
  %1376 = vmatpush1.msra.mxu0 0.0
  %1377 = vmatprep.subr.mxu0 0.0
  %1378 = vmatpush1.msra.mxu0 0.0
  %1379 = vmatprep.subr.mxu0 0.0
  %1380 = vmatpush1.msra.mxu0 0.0
  %1381 = vmatprep.subr.mxu0 0.0
  %1382 = vmatpush1.msra.mxu0 0.0
  %1383 = vmatprep.subr.mxu0 0.0
  %1384 = vmatpush1.msra.mxu0 0.0
  %1385 = vmatprep.subr.mxu0 0.0
  %1386 = vmatpush1.msra.mxu0 0.0
  %1387 = vmatprep.subr.mxu0 0.0
  %1388 = vmatpush1.msra.mxu0 0.0
  %1389 = vmatprep.subr.mxu0 0.0
  %1390 = vmatpush1.msra.mxu0 0.0
  %1391 = vmatprep.subr.mxu0 0.0
  %1392 = vmatpush1.msra.mxu0 0.0
  %1393 = vmatprep.subr.mxu0 0.0
  %1394 = vmatpush1.msra.mxu0 0.0
  %1395 = vmatprep.subr.mxu0 0.0
  %1396 = vmatpush1.msra.mxu0 0.0
  %1397 = vmatprep.subr.mxu0 0.0
  %1398 = vmatpush1.msra.mxu0 0.0
  %1399 = vmatprep.subr.mxu0 0.0
  %1400 = vmatpush1.msra.mxu0 0.0
  %1401 = vmatprep.subr.mxu0 0.0
  %1402 = vmatpush1.msra.mxu0 0.0
  %1403 = vmatprep.subr.mxu0 0.0
  %1404 = vmatpush1.msra.mxu0 0.0
  %1405 = vmatprep.subr.mxu0 0.0
  %1406 = vmatpush1.msra.mxu0 0.0
  %1407 = vmatprep.subr.mxu0 0.0
  %1408 = vmatpush1.msra.mxu0 0.0
  %1409 = vmatprep.subr.mxu0 0.0
  %1410 = vmatpush1.msra.mxu0 0.0
  %1411 = vmatprep.subr.mxu0 0.0
  %1412 = vmatpush1.msra.mxu0 0.0
  %1413 = vmatprep.subr.mxu0 0.0
  %1414 = vmatpush1.msra.mxu0 0.0
  %1415 = vmatprep.subr.mxu0 0.0
  %1416 = vmatpush1.msra.mxu0 0.0
  %1417 = vmatprep.subr.mxu0 0.0
  %1418 = vmatpush1.msra.mxu0 0.0
  %1419 = vmatprep.subr.mxu0 0.0
  %1420 = vmatpush1.msra.mxu0 0.0
  %1421 = vmatprep.subr.mxu0 0.0
  %1422 = vmatpush1.msra.mxu0 0.0
  %1423 = vmatprep.subr.mxu0 0.0
  %1424 = vmatpush1.msra.mxu0 0.0
  %1425 = vmatprep.subr.mxu0 0.0
  %1426 = vmatpush1.msra.mxu0 0.0
  %1427 = vmatprep.mubr.f32.mxu0 0.0
  %1428 = vmatmul.mubr.f32.gmra.mrb[0].mxu0 %v1361
  %v1429 = vpop.f32.mrb[0].mxu0
  %v1430 = vadd.f32 0.0, %v1429
  %v1431 = vpop.f32.mrb[0].mxu0
  %1432 = vdwg.mxu0
  %v1433 = vadd.f32 %v1052, %v1430
  %v1434 = vtanh.pop %v1433
  %v1435 = vmul.f32 %v1434, 0.5
  %v1436 = vadd.f32 %v1435, 0.5
  %v1437 = vmul.f32 %v1436, %v1351
  %1439 = vrot.lane.b32.xlu0 %v1434, 32
  %v1440 = vpop.permute.xlu0 %1439
  %v1442 = vmul.f32 %v1436, %v1440
  %1444 = vrot.lane.b32.xlu0 %v1442, 32
  %v1445 = vpop.permute.xlu0 %1444
  %v1447 = vadd.f32 %v1437, %v1445
  %v1448 = vtanh.pop %v1447
  %1450 = vrot.lane.b32.xlu0 %v1448, 32
  %v1451 = vpop.permute.xlu0 %1450
  %v1453 = vmul.f32 %v1436, %v1451
  %1455 = vrot.lane.b32.xlu0 %v1453, 64
  %v1456 = vpop.permute.xlu0 %1455
  %v1457 = vsel %vm183, %v1456, 0
  %1459 = vmatprep.subr.mxu0 0.0
  %1460 = vmatpush1.msra.mxu0 %v954
  %1461 = vmatprep.subr.mxu0 0.0
  %1462 = vmatpush1.msra.mxu0 %v955
  %1463 = vmatprep.subr.mxu0 0.0
  %1464 = vmatpush1.msra.mxu0 %v956
  %1465 = vmatprep.subr.mxu0 0.0
  %1466 = vmatpush1.msra.mxu0 %v957
  %1467 = vmatprep.subr.mxu0 0.0
  %1468 = vmatpush1.msra.mxu0 0.0
  %1469 = vmatprep.subr.mxu0 0.0
  %1470 = vmatpush1.msra.mxu0 0.0
  %1471 = vmatprep.subr.mxu0 0.0
  %1472 = vmatpush1.msra.mxu0 0.0
  %1473 = vmatprep.subr.mxu0 0.0
  %1474 = vmatpush1.msra.mxu0 0.0
  %1475 = vmatprep.subr.mxu0 0.0
  %1476 = vmatpush1.msra.mxu0 0.0
  %1477 = vmatprep.subr.mxu0 0.0
  %1478 = vmatpush1.msra.mxu0 0.0
  %1479 = vmatprep.subr.mxu0 0.0
  %1480 = vmatpush1.msra.mxu0 0.0
  %1481 = vmatprep.subr.mxu0 0.0
  %1482 = vmatpush1.msra.mxu0 0.0
  %1483 = vmatprep.subr.mxu0 0.0
  %1484 = vmatpush1.msra.mxu0 0.0
  %1485 = vmatprep.subr.mxu0 0.0
  %1486 = vmatpush1.msra.mxu0 0.0
  %1487 = vmatprep.subr.mxu0 0.0
  %1488 = vmatpush1.msra.mxu0 0.0
  %1489 = vmatprep.subr.mxu0 0.0
  %1490 = vmatpush1.msra.mxu0 0.0
  %1491 = vmatprep.subr.mxu0 0.0
  %1492 = vmatpush1.msra.mxu0 0.0
  %1493 = vmatprep.subr.mxu0 0.0
  %1494 = vmatpush1.msra.mxu0 0.0
  %1495 = vmatprep.subr.mxu0 0.0
  %1496 = vmatpush1.msra.mxu0 0.0
  %1497 = vmatprep.subr.mxu0 0.0
  %1498 = vmatpush1.msra.mxu0 0.0
  %1499 = vmatprep.subr.mxu0 0.0
  %1500 = vmatpush1.msra.mxu0 0.0
  %1501 = vmatprep.subr.mxu0 0.0
  %1502 = vmatpush1.msra.mxu0 0.0
  %1503 = vmatprep.subr.mxu0 0.0
  %1504 = vmatpush1.msra.mxu0 0.0
  %1505 = vmatprep.subr.mxu0 0.0
  %1506 = vmatpush1.msra.mxu0 0.0
  %1507 = vmatprep.subr.mxu0 0.0
  %1508 = vmatpush1.msra.mxu0 0.0
  %1509 = vmatprep.subr.mxu0 0.0
  %1510 = vmatpush1.msra.mxu0 0.0
  %1511 = vmatprep.subr.mxu0 0.0
  %1512 = vmatpush1.msra.mxu0 0.0
  %1513 = vmatprep.subr.mxu0 0.0
  %1514 = vmatpush1.msra.mxu0 0.0
  %1515 = vmatprep.subr.mxu0 0.0
  %1516 = vmatpush1.msra.mxu0 0.0
  %1517 = vmatprep.subr.mxu0 0.0
  %1518 = vmatpush1.msra.mxu0 0.0
  %1519 = vmatprep.subr.mxu0 0.0
  %1520 = vmatpush1.msra.mxu0 0.0
  %1521 = vmatprep.subr.mxu0 0.0
  %1522 = vmatpush1.msra.mxu0 0.0
  %1523 = vmatprep.mubr.f32.mxu0 0.0
  %1524 = vmatmul.mubr.f32.gmra.mrb[0].mxu0 %v1457
  %v1525 = vpop.f32.mrb[0].mxu0
  %v1526 = vadd.f32 0.0, %v1525
  %v1527 = vpop.f32.mrb[0].mxu0
  %1528 = vdwg.mxu0
  %v1529 = vadd.f32 %v1057, %v1526
  %v1530 = vtanh.pop %v1529
  %v1531 = vmul.f32 %v1530, 0.5
  %v1532 = vadd.f32 %v1531, 0.5
  %v1533 = vmul.f32 %v1532, %v1447
  %1535 = vrot.lane.b32.xlu0 %v1530, 32
  %v1536 = vpop.permute.xlu0 %1535
  %v1538 = vmul.f32 %v1532, %v1536
  %1540 = vrot.lane.b32.xlu0 %v1538, 32
  %v1541 = vpop.permute.xlu0 %1540
  %v1543 = vadd.f32 %v1533, %v1541
  %v1544 = vtanh.pop %v1543
  %1546 = vrot.lane.b32.xlu0 %v1544, 32
  %v1547 = vpop.permute.xlu0 %1546
  %v1549 = vmul.f32 %v1532, %v1547
  %1551 = vrot.lane.b32.xlu0 %v1549, 64
  %v1552 = vpop.permute.xlu0 %1551
  %v1553 = vsel %vm183, %v1552, 0
  %1555 = vmatprep.subr.mxu0 0.0
  %1556 = vmatpush1.msra.mxu0 %v954
  %1557 = vmatprep.subr.mxu0 0.0
  %1558 = vmatpush1.msra.mxu0 %v955
  %1559 = vmatprep.subr.mxu0 0.0
  %1560 = vmatpush1.msra.mxu0 %v956
  %1561 = vmatprep.subr.mxu0 0.0
  %1562 = vmatpush1.msra.mxu0 %v957
  %1563 = vmatprep.subr.mxu0 0.0
  %1564 = vmatpush1.msra.mxu0 0.0
  %1565 = vmatprep.subr.mxu0 0.0
  %1566 = vmatpush1.msra.mxu0 0.0
  %1567 = vmatprep.subr.mxu0 0.0
  %1568 = vmatpush1.msra.mxu0 0.0
  %1569 = vmatprep.subr.mxu0 0.0
  %1570 = vmatpush1.msra.mxu0 0.0
  %1571 = vmatprep.subr.mxu0 0.0
  %1572 = vmatpush1.msra.mxu0 0.0
  %1573 = vmatprep.subr.mxu0 0.0
  %1574 = vmatpush1.msra.mxu0 0.0
  %1575 = vmatprep.subr.mxu0 0.0
  %1576 = vmatpush1.msra.mxu0 0.0
  %1577 = vmatprep.subr.mxu0 0.0
  %1578 = vmatpush1.msra.mxu0 0.0
  %1579 = vmatprep.subr.mxu0 0.0
  %1580 = vmatpush1.msra.mxu0 0.0
  %1581 = vmatprep.subr.mxu0 0.0
  %1582 = vmatpush1.msra.mxu0 0.0
  %1583 = vmatprep.subr.mxu0 0.0
  %1584 = vmatpush1.msra.mxu0 0.0
  %1585 = vmatprep.subr.mxu0 0.0
  %1586 = vmatpush1.msra.mxu0 0.0
  %1587 = vmatprep.subr.mxu0 0.0
  %1588 = vmatpush1.msra.mxu0 0.0
  %1589 = vmatprep.subr.mxu0 0.0
  %1590 = vmatpush1.msra.mxu0 0.0
  %1591 = vmatprep.subr.mxu0 0.0
  %1592 = vmatpush1.msra.mxu0 0.0
  %1593 = vmatprep.subr.mxu0 0.0
  %1594 = vmatpush1.msra.mxu0 0.0
  %1595 = vmatprep.subr.mxu0 0.0
  %1596 = vmatpush1.msra.mxu0 0.0
  %1597 = vmatprep.subr.mxu0 0.0
  %1598 = vmatpush1.msra.mxu0 0.0
  %1599 = vmatprep.subr.mxu0 0.0
  %1600 = vmatpush1.msra.mxu0 0.0
  %1601 = vmatprep.subr.mxu0 0.0
  %1602 = vmatpush1.msra.mxu0 0.0
  %1603 = vmatprep.subr.mxu0 0.0
  %1604 = vmatpush1.msra.mxu0 0.0
  %1605 = vmatprep.subr.mxu0 0.0
  %1606 = vmatpush1.msra.mxu0 0.0
  %1607 = vmatprep.subr.mxu0 0.0
  %1608 = vmatpush1.msra.mxu0 0.0
  %1609 = vmatprep.subr.mxu0 0.0
  %1610 = vmatpush1.msra.mxu0 0.0
  %1611 = vmatprep.subr.mxu0 0.0
  %1612 = vmatpush1.msra.mxu0 0.0
  %1613 = vmatprep.subr.mxu0 0.0
  %1614 = vmatpush1.msra.mxu0 0.0
  %1615 = vmatprep.subr.mxu0 0.0
  %1616 = vmatpush1.msra.mxu0 0.0
  %1617 = vmatprep.subr.mxu0 0.0
  %1618 = vmatpush1.msra.mxu0 0.0
  %1619 = vmatprep.mubr.f32.mxu0 0.0
  %1620 = vmatmul.mubr.f32.gmra.mrb[0].mxu0 %v1553
  %v1621 = vpop.f32.mrb[0].mxu0
  %v1622 = vadd.f32 0.0, %v1621
  %v1623 = vpop.f32.mrb[0].mxu0
  %1624 = vdwg.mxu0
  %v1625 = vadd.f32 %v1062, %v1622
  %v1626 = vtanh.pop %v1625
  %v1627 = vmul.f32 %v1626, 0.5
  %v1628 = vadd.f32 %v1627, 0.5
  %v1629 = vmul.f32 %v1628, %v1543
  %1631 = vrot.lane.b32.xlu0 %v1626, 32
  %v1632 = vpop.permute.xlu0 %1631
  %v1634 = vmul.f32 %v1628, %v1632
  %1636 = vrot.lane.b32.xlu0 %v1634, 32
  %v1637 = vpop.permute.xlu0 %1636
  %v1639 = vadd.f32 %v1629, %v1637
  %v1640 = vtanh.pop %v1639
  %1642 = vrot.lane.b32.xlu0 %v1640, 32
  %v1643 = vpop.permute.xlu0 %1642
  %v1645 = vmul.f32 %v1628, %v1643
  %1647 = vrot.lane.b32.xlu0 %v1645, 64
  %v1648 = vpop.permute.xlu0 %1647
  %v1649 = vsel %vm183, %v1648, 0
  %1651 = vmatprep.subr.mxu0 0.0
  %1652 = vmatpush1.msra.mxu0 %v954
  %1653 = vmatprep.subr.mxu0 0.0
  %1654 = vmatpush1.msra.mxu0 %v955
  %1655 = vmatprep.subr.mxu0 0.0
  %1656 = vmatpush1.msra.mxu0 %v956
  %1657 = vmatprep.subr.mxu0 0.0
  %1658 = vmatpush1.msra.mxu0 %v957
  %1659 = vmatprep.subr.mxu0 0.0
  %1660 = vmatpush1.msra.mxu0 0.0
  %1661 = vmatprep.subr.mxu0 0.0
  %1662 = vmatpush1.msra.mxu0 0.0
  %1663 = vmatprep.subr.mxu0 0.0
  %1664 = vmatpush1.msra.mxu0 0.0
  %1665 = vmatprep.subr.mxu0 0.0
  %1666 = vmatpush1.msra.mxu0 0.0
  %1667 = vmatprep.subr.mxu0 0.0
  %1668 = vmatpush1.msra.mxu0 0.0
  %1669 = vmatprep.subr.mxu0 0.0
  %1670 = vmatpush1.msra.mxu0 0.0
  %1671 = vmatprep.subr.mxu0 0.0
  %1672 = vmatpush1.msra.mxu0 0.0
  %1673 = vmatprep.subr.mxu0 0.0
  %1674 = vmatpush1.msra.mxu0 0.0
  %1675 = vmatprep.subr.mxu0 0.0
  %1676 = vmatpush1.msra.mxu0 0.0
  %1677 = vmatprep.subr.mxu0 0.0
  %1678 = vmatpush1.msra.mxu0 0.0
  %1679 = vmatprep.subr.mxu0 0.0
  %1680 = vmatpush1.msra.mxu0 0.0
  %1681 = vmatprep.subr.mxu0 0.0
  %1682 = vmatpush1.msra.mxu0 0.0
  %1683 = vmatprep.subr.mxu0 0.0
  %1684 = vmatpush1.msra.mxu0 0.0
  %1685 = vmatprep.subr.mxu0 0.0
  %1686 = vmatpush1.msra.mxu0 0.0
  %1687 = vmatprep.subr.mxu0 0.0
  %1688 = vmatpush1.msra.mxu0 0.0
  %1689 = vmatprep.subr.mxu0 0.0
  %1690 = vmatpush1.msra.mxu0 0.0
  %1691 = vmatprep.subr.mxu0 0.0
  %1692 = vmatpush1.msra.mxu0 0.0
  %1693 = vmatprep.subr.mxu0 0.0
  %1694 = vmatpush1.msra.mxu0 0.0
  %1695 = vmatprep.subr.mxu0 0.0
  %1696 = vmatpush1.msra.mxu0 0.0
  %1697 = vmatprep.subr.mxu0 0.0
  %1698 = vmatpush1.msra.mxu0 0.0
  %1699 = vmatprep.subr.mxu0 0.0
  %1700 = vmatpush1.msra.mxu0 0.0
  %1701 = vmatprep.subr.mxu0 0.0
  %1702 = vmatpush1.msra.mxu0 0.0
  %1703 = vmatprep.subr.mxu0 0.0
  %1704 = vmatpush1.msra.mxu0 0.0
  %1705 = vmatprep.subr.mxu0 0.0
  %1706 = vmatpush1.msra.mxu0 0.0
  %1707 = vmatprep.subr.mxu0 0.0
  %1708 = vmatpush1.msra.mxu0 0.0
  %1709 = vmatprep.subr.mxu0 0.0
  %1710 = vmatpush1.msra.mxu0 0.0
  %1711 = vmatprep.subr.mxu0 0.0
  %1712 = vmatpush1.msra.mxu0 0.0
  %1713 = vmatprep.subr.mxu0 0.0
  %1714 = vmatpush1.msra.mxu0 0.0
  %1715 = vmatprep.mubr.f32.mxu0 0.0
  %1716 = vmatmul.mubr.f32.gmra.mrb[0].mxu0 %v1649
  %v1717 = vpop.f32.mrb[0].mxu0
  %v1718 = vadd.f32 0.0, %v1717
  %v1719 = vpop.f32.mrb[0].mxu0
  %1720 = vdwg.mxu0
  %v1721 = vadd.f32 %v1067, %v1718
  %v1722 = vtanh.pop %v1721
  %v1723 = vmul.f32 %v1722, 0.5
  %v1724 = vadd.f32 %v1723, 0.5
  %v1725 = vmul.f32 %v1724, %v1639
  %1727 = vrot.lane.b32.xlu0 %v1722, 32
  %v1728 = vpop.permute.xlu0 %1727
  %v1730 = vmul.f32 %v1724, %v1728
  %1732 = vrot.lane.b32.xlu0 %v1730, 32
  %v1733 = vpop.permute.xlu0 %1732
  %v1735 = vadd.f32 %v1725, %v1733
  %v1736 = vtanh.pop %v1735
  %1738 = vrot.lane.b32.xlu0 %v1736, 32
  %v1739 = vpop.permute.xlu0 %1738
  %v1741 = vmul.f32 %v1724, %v1739
  %1743 = vrot.lane.b32.xlu0 %v1741, 64
  %v1744 = vpop.permute.xlu0 %1743
  %v1745 = vsel %vm183, %v1744, 0
  %1747 = vmatprep.subr.mxu0 0.0
  %1748 = vmatpush1.msra.mxu0 %v954
  %1749 = vmatprep.subr.mxu0 0.0
  %1750 = vmatpush1.msra.mxu0 %v955
  %1751 = vmatprep.subr.mxu0 0.0
  %1752 = vmatpush1.msra.mxu0 %v956
  %1753 = vmatprep.subr.mxu0 0.0
  %1754 = vmatpush1.msra.mxu0 %v957
  %1755 = vmatprep.subr.mxu0 0.0
  %1756 = vmatpush1.msra.mxu0 0.0
  %1757 = vmatprep.subr.mxu0 0.0
  %1758 = vmatpush1.msra.mxu0 0.0
  %1759 = vmatprep.subr.mxu0 0.0
  %1760 = vmatpush1.msra.mxu0 0.0
  %1761 = vmatprep.subr.mxu0 0.0
  %1762 = vmatpush1.msra.mxu0 0.0
  %1763 = vmatprep.subr.mxu0 0.0
  %1764 = vmatpush1.msra.mxu0 0.0
  %1765 = vmatprep.subr.mxu0 0.0
  %1766 = vmatpush1.msra.mxu0 0.0
  %1767 = vmatprep.subr.mxu0 0.0
  %1768 = vmatpush1.msra.mxu0 0.0
  %1769 = vmatprep.subr.mxu0 0.0
  %1770 = vmatpush1.msra.mxu0 0.0
  %1771 = vmatprep.subr.mxu0 0.0
  %1772 = vmatpush1.msra.mxu0 0.0
  %1773 = vmatprep.subr.mxu0 0.0
  %1774 = vmatpush1.msra.mxu0 0.0
  %1775 = vmatprep.subr.mxu0 0.0
  %1776 = vmatpush1.msra.mxu0 0.0
  %1777 = vmatprep.subr.mxu0 0.0
  %1778 = vmatpush1.msra.mxu0 0.0
  %1779 = vmatprep.subr.mxu0 0.0
  %1780 = vmatpush1.msra.mxu0 0.0
  %1781 = vmatprep.subr.mxu0 0.0
  %1782 = vmatpush1.msra.mxu0 0.0
  %1783 = vmatprep.subr.mxu0 0.0
  %1784 = vmatpush1.msra.mxu0 0.0
  %1785 = vmatprep.subr.mxu0 0.0
  %1786 = vmatpush1.msra.mxu0 0.0
  %1787 = vmatprep.subr.mxu0 0.0
  %1788 = vmatpush1.msra.mxu0 0.0
  %1789 = vmatprep.subr.mxu0 0.0
  %1790 = vmatpush1.msra.mxu0 0.0
  %1791 = vmatprep.subr.mxu0 0.0
  %1792 = vmatpush1.msra.mxu0 0.0
  %1793 = vmatprep.subr.mxu0 0.0
  %1794 = vmatpush1.msra.mxu0 0.0
  %1795 = vmatprep.subr.mxu0 0.0
  %1796 = vmatpush1.msra.mxu0 0.0
  %1797 = vmatprep.subr.mxu0 0.0
  %1798 = vmatpush1.msra.mxu0 0.0
  %1799 = vmatprep.subr.mxu0 0.0
  %1800 = vmatpush1.msra.mxu0 0.0
  %1801 = vmatprep.subr.mxu0 0.0
  %1802 = vmatpush1.msra.mxu0 0.0
  %1803 = vmatprep.subr.mxu0 0.0
  %1804 = vmatpush1.msra.mxu0 0.0
  %1805 = vmatprep.subr.mxu0 0.0
  %1806 = vmatpush1.msra.mxu0 0.0
  %1807 = vmatprep.subr.mxu0 0.0
  %1808 = vmatpush1.msra.mxu0 0.0
  %1809 = vmatprep.subr.mxu0 0.0
  %1810 = vmatpush1.msra.mxu0 0.0
  %1811 = vmatprep.mubr.f32.mxu0 0.0
  %1812 = vmatmul.mubr.f32.gmra.mrb[0].mxu0 %v1745
  %v1813 = vpop.f32.mrb[0].mxu0
  %v1814 = vadd.f32 0.0, %v1813
  %v1815 = vpop.f32.mrb[0].mxu0
  %1816 = vdwg.mxu0
  %v1817 = vadd.f32 %v1072, %v1814
  %v1818 = vtanh.pop %v1817
  %v1819 = vmul.f32 %v1818, 0.5
  %v1820 = vadd.f32 %v1819, 0.5
  %v1821 = vmul.f32 %v1820, %v1735
  %1823 = vrot.lane.b32.xlu0 %v1818, 32
  %v1824 = vpop.permute.xlu0 %1823
  %v1826 = vmul.f32 %v1820, %v1824
  %1828 = vrot.lane.b32.xlu0 %v1826, 32
  %v1829 = vpop.permute.xlu0 %1828
  %v1831 = vadd.f32 %v1821, %v1829
  %v1832 = vtanh.pop %v1831
  %1834 = vrot.lane.b32.xlu0 %v1832, 32
  %v1835 = vpop.permute.xlu0 %1834
  %v1837 = vmul.f32 %v1820, %v1835
  %v1838 = vld [vmem:[%s7] sm:$0xff]
  %v1839 = vld [vmem:[%s7 + $0x8] sm:$0xff]
  %v1840 = vld [vmem:[%s7 + $0x10] sm:$0xff]
  %v1841 = vld [vmem:[%s7 + $0x18] sm:$0xff]
  %v1842 = vld [vmem:[%s8] sm:$0x1]
  %v1844 = vlaneseq
  %v1845 = vshrl.u32 %v1844, 7
  %v1846 = vsub.s32 0, %v1845
  %v1847 = vrot.slane %v1842, %v1846
  %1850 = vrot.lane.b32.xlu0 %v1837, 64
  %v1851 = vpop.permute.xlu0 %1850
  %v1852 = vsel %vm183, %v1851, 0
  %1854 = vmatprep.subr.mxu0 0.0
  %1855 = vmatpush1.msra.mxu0 %v1838
  %1856 = vmatprep.subr.mxu0 0.0
  %1857 = vmatpush1.msra.mxu0 %v1839
  %1858 = vmatprep.subr.mxu0 0.0
  %1859 = vmatpush1.msra.mxu0 %v1840
  %1860 = vmatprep.subr.mxu0 0.0
  %1861 = vmatpush1.msra.mxu0 %v1841
  %1862 = vmatprep.subr.mxu0 0.0
  %1863 = vmatpush1.msra.mxu0 0.0
  %1864 = vmatprep.subr.mxu0 0.0
  %1865 = vmatpush1.msra.mxu0 0.0
  %1866 = vmatprep.subr.mxu0 0.0
  %1867 = vmatpush1.msra.mxu0 0.0
  %1868 = vmatprep.subr.mxu0 0.0
  %1869 = vmatpush1.msra.mxu0 0.0
  %1870 = vmatprep.subr.mxu0 0.0
  %1871 = vmatpush1.msra.mxu0 0.0
  %1872 = vmatprep.subr.mxu0 0.0
  %1873 = vmatpush1.msra.mxu0 0.0
  %1874 = vmatprep.subr.mxu0 0.0
  %1875 = vmatpush1.msra.mxu0 0.0
  %1876 = vmatprep.subr.mxu0 0.0
  %1877 = vmatpush1.msra.mxu0 0.0
  %1878 = vmatprep.subr.mxu0 0.0
  %1879 = vmatpush1.msra.mxu0 0.0
  %1880 = vmatprep.subr.mxu0 0.0
  %1881 = vmatpush1.msra.mxu0 0.0
  %1882 = vmatprep.subr.mxu0 0.0
  %1883 = vmatpush1.msra.mxu0 0.0
  %1884 = vmatprep.subr.mxu0 0.0
  %1885 = vmatpush1.msra.mxu0 0.0
  %1886 = vmatprep.subr.mxu0 0.0
  %1887 = vmatpush1.msra.mxu0 0.0
  %1888 = vmatprep.subr.mxu0 0.0
  %1889 = vmatpush1.msra.mxu0 0.0
  %1890 = vmatprep.subr.mxu0 0.0
  %1891 = vmatpush1.msra.mxu0 0.0
  %1892 = vmatprep.subr.mxu0 0.0
  %1893 = vmatpush1.msra.mxu0 0.0
  %1894 = vmatprep.subr.mxu0 0.0
  %1895 = vmatpush1.msra.mxu0 0.0
  %1896 = vmatprep.subr.mxu0 0.0
  %1897 = vmatpush1.msra.mxu0 0.0
  %1898 = vmatprep.subr.mxu0 0.0
  %1899 = vmatpush1.msra.mxu0 0.0
  %1900 = vmatprep.subr.mxu0 0.0
  %1901 = vmatpush1.msra.mxu0 0.0
  %1902 = vmatprep.subr.mxu0 0.0
  %1903 = vmatpush1.msra.mxu0 0.0
  %1904 = vmatprep.subr.mxu0 0.0
  %1905 = vmatpush1.msra.mxu0 0.0
  %1906 = vmatprep.subr.mxu0 0.0
  %1907 = vmatpush1.msra.mxu0 0.0
  %1908 = vmatprep.subr.mxu0 0.0
  %1909 = vmatpush1.msra.mxu0 0.0
  %1910 = vmatprep.subr.mxu0 0.0
  %1911 = vmatpush1.msra.mxu0 0.0
  %1912 = vmatprep.subr.mxu0 0.0
  %1913 = vmatpush1.msra.mxu0 0.0
  %1914 = vmatprep.subr.mxu0 0.0
  %1915 = vmatpush1.msra.mxu0 0.0
  %1916 = vmatprep.subr.mxu0 0.0
  %1917 = vmatpush1.msra.mxu0 0.0
  %1918 = vmatprep.mubr.f32.mxu0 0.0
  %1919 = vmatmul.mubr.f32.gmra.mrb[0].mxu0 %v1169
  %v1920 = vpop.f32.mrb[0].mxu0
  %v1921 = vadd.f32 %v1847, %v1920
  %v1922 = vpop.f32.mrb[0].mxu0
  %1923 = vmatprep.mubr.f32.mxu0 0.0
  %1924 = vmatmul.mubr.f32.gmra.mrb[0].mxu0 %v1265
  %v1925 = vpop.f32.mrb[0].mxu0
  %v1926 = vadd.f32 %v1847, %v1925
  %v1927 = vpop.f32.mrb[0].mxu0
  %1928 = vmatprep.mubr.f32.mxu0 0.0
  %1929 = vmatmul.mubr.f32.gmra.mrb[0].mxu0 %v1361
  %v1930 = vpop.f32.mrb[0].mxu0
  %v1931 = vadd.f32 %v1847, %v1930
  %v1932 = vpop.f32.mrb[0].mxu0
  %1933 = vmatprep.mubr.f32.mxu0 0.0
  %1934 = vmatmul.mubr.f32.gmra.mrb[0].mxu0 %v1457
  %v1935 = vpop.f32.mrb[0].mxu0
  %v1936 = vadd.f32 %v1847, %v1935
  %v1937 = vpop.f32.mrb[0].mxu0
  %1938 = vmatprep.mubr.f32.mxu0 0.0
  %1939 = vmatmul.mubr.f32.gmra.mrb[0].mxu0 %v1553
  %v1940 = vpop.f32.mrb[0].mxu0
  %v1941 = vadd.f32 %v1847, %v1940
  %v1942 = vpop.f32.mrb[0].mxu0
  %1943 = vmatprep.mubr.f32.mxu0 0.0
  %1944 = vmatmul.mubr.f32.gmra.mrb[0].mxu0 %v1649
  %v1945 = vpop.f32.mrb[0].mxu0
  %v1946 = vadd.f32 %v1847, %v1945
  %v1947 = vpop.f32.mrb[0].mxu0
  %1948 = vmatprep.mubr.f32.mxu0 0.0
  %1949 = vmatmul.mubr.f32.gmra.mrb[0].mxu0 %v1745
  %v1950 = vpop.f32.mrb[0].mxu0
  %v1951 = vadd.f32 %v1847, %v1950
  %v1952 = vpop.f32.mrb[0].mxu0
  %1953 = vmatprep.mubr.f32.mxu0 0.0
  %1954 = vmatmul.mubr.f32.gmra.mrb[0].mxu0 %v1852
  %v1955 = vpop.f32.mrb[0].mxu0
  %v1956 = vadd.f32 %v1847, %v1955
  %v1957 = vpop.f32.mrb[0].mxu0
  %1958 = vdwg.mxu0
  %vm1959 = vcmask 64512
  %1960 = vst.msk [vmem:[%s9] sm:$0xff] %vm1959, %v1921
  %1961 = vst.msk [vmem:[%s9 + $0x8] sm:$0xff] %vm1959, %v1926
  %1962 = vst.msk [vmem:[%s9 + $0x10] sm:$0xff] %vm1959, %v1931
  %1963 = vst.msk [vmem:[%s9 + $0x18] sm:$0xff] %vm1959, %v1936
  %1964 = vst.msk [vmem:[%s9 + $0x20] sm:$0xff] %vm1959, %v1941
  %1965 = vst.msk [vmem:[%s9 + $0x28] sm:$0xff] %vm1959, %v1946
  %1966 = vst.msk [vmem:[%s9 + $0x30] sm:$0xff] %vm1959, %v1951
  %1967 = vst.msk [vmem:[%s9 + $0x38] sm:$0xff] %vm1959, %v1956
  // Predicated region
  $region38: #{my_lstm_model_forward.1} parent=0 // pred_check
    _
  $region39: #{my_lstm_model_forward.1} parent=0 // pred_check_branch
    %1969 = sbr.rel (0) target = $region41
  $region40: #{my_lstm_model_forward.1} parent=0 // pred_region
    _
  $region41: #{my_lstm_model_forward.1} parent=0 // pred_fallthru
    _
  // Predicated region
  $region42: #{my_lstm_model_forward.1} parent=0 // pred_check
    _
  $region43: #{my_lstm_model_forward.1} parent=0 // pred_check_branch
    %1971 = sbr.rel (0) target = $region45
  $region44: #{my_lstm_model_forward.1} parent=0 // pred_region
    _
  $region45: #{my_lstm_model_forward.1} parent=0 // pred_fallthru
    _

</llo_original>
